<compile_context>
chip_gen: v6e
topology: v6e:2x2x1
jax: 0.10.0
libtpu: 0.0.40
codegen_flags: <defaults>
</compile_context>

<pallas_src>
import numpy as np
import jax
import jax.numpy as jnp
from jax.experimental import pallas as pl
from jax.experimental.pallas import tpu as pltpu


# ----------------------------- fused kernel ----------------------------------


def gnn_forward_kernel(nodes_ref, edges_ref, idx_et_ref, idx_2e_ref,
                       w_node_ref, w_edge_ref, w_ab_ref, w_e_ref, bias_ref,
                       w_h1_ref, w_h2_ref, out_ref):
    f32 = jnp.float32
    x_in = nodes_ref[...]                                     # (N, Fn)
    e_in = edges_ref[...]                                     # (E, Fe)
    n_nodes = x_in.shape[0]
    n_edges = e_in.shape[0]
    hidden = w_node_ref.shape[1]
    num_layers = w_ab_ref.shape[0]

    # --- node / edge embeddings + ReLU ---
    x = jnp.maximum(
        jnp.dot(x_in, w_node_ref[...], preferred_element_type=f32)
        + bias_ref[0:1, :], 0.0)                              # (N, H)
    edge_attr = jnp.maximum(
        jnp.dot(e_in, w_edge_ref[...], preferred_element_type=f32)
        + bias_ref[1:2, :], 0.0)                              # (E, H)

    # --- gather / scatter expressed as one-hot matmuls (MXU), no dynamic gather ---
    idx_et = idx_et_ref[...]                                  # (E, 2) int32: [row, col]
    node_iota_en = jax.lax.broadcasted_iota(jnp.int32, (n_edges, n_nodes), 1)
    row_oh = (node_iota_en == idx_et[:, 0:1]).astype(f32)     # (E, N): gathers x[row]
    col_oh = (node_iota_en == idx_et[:, 1:2]).astype(f32)     # (E, N): gathers x[col]

    idx_2e = idx_2e_ref[...]                                  # (2, E) int32
    node_iota_ne = jax.lax.broadcasted_iota(jnp.int32, (n_nodes, n_edges), 0)
    scat_oh = (node_iota_ne == idx_2e[1:2, :]).astype(f32)    # (N, E): scatter by col
    deg = jnp.sum(scat_oh, axis=1, keepdims=True)             # (N, 1) in-degree
    inv_deg = pl.reciprocal(jnp.maximum(deg, 1.0), approx=False)
    # Degree normalization folded into the scatter operand once (rows with deg==0 are
    # all-zero, so the masked-mean "0 if no incoming edge" semantics are preserved).
    scat_mean = scat_oh * inv_deg                             # (N, E)

    # --- loop-invariant edge term hoisted: one wide matmul for all layers ---
    edge_terms = jnp.dot(edge_attr, w_e_ref[...],
                         preferred_element_type=f32)          # (E, L*H)

    for l in range(num_layers):                               # static unroll over layers
        # transform-then-gather:  (N,H) @ (H,2H)  then one-hot gathers
        t = jnp.dot(x, w_ab_ref[l], preferred_element_type=f32)          # (N, 2H)
        ta = t[:, :hidden]                                                # x @ Wa
        tb = t[:, hidden:]                                                # x @ Wb
        msg = (jnp.dot(row_oh, ta, preferred_element_type=f32)
               + jnp.dot(col_oh, tb, preferred_element_type=f32)
               + edge_terms[:, l * hidden:(l + 1) * hidden]
               + bias_ref[2 + l:3 + l, :])                                # bl + be
        x = jnp.maximum(
            jnp.dot(scat_mean, msg, preferred_element_type=f32), 0.0)     # mean + ReLU

    # --- readout: mean over nodes + MLP head (dropout == identity in eval) ---
    ge = jnp.mean(x, axis=0, keepdims=True)                   # (1, H)
    h_half = w_h1_ref.shape[1]
    out_dim = w_h2_ref.shape[1]
    b_h1 = bias_ref[2 + num_layers:3 + num_layers, :h_half]
    b_h2 = bias_ref[3 + num_layers:4 + num_layers, :out_dim]
    h = jnp.maximum(
        jnp.dot(ge, w_h1_ref[...], preferred_element_type=f32) + b_h1, 0.0)
    out_ref[...] = jnp.dot(h, w_h2_ref[...], preferred_element_type=f32) + b_h2


# ----------------------------- wrapper ----------------------------------------


def gnn_forward(node_features, edge_index, edge_features, params):
    hidden = params["w_node"].shape[1]
    num_layers = params["wa"].shape[0]
    out_dim = params["w_h2"].shape[1]
    edge_index = edge_index.astype(jnp.int32)

    # ---- wrapper-side parameter packing (done once, outside the kernel) ----
    # Fused per-layer weight: [Wa | Wb]  -> (L, H, 2H)
    w_ab = jnp.concatenate([params["wa"], params["wb"]], axis=-1)
    # Edge weights concatenated along output axis -> (H, L*H) for the hoisted matmul.
    w_e_all = jnp.transpose(params["we"], (1, 0, 2)).reshape(hidden, num_layers * hidden)
    # Combined per-layer bias (bl + be), plus all other biases, packed into one tensor.
    pad_to_h = lambda b: jnp.pad(b.reshape(1, -1),
                                 ((0, 0), (0, hidden - b.shape[-1])))
    biases = jnp.concatenate([
        params["b_node"].reshape(1, hidden),
        params["b_edge"].reshape(1, hidden),
        (params["bl"] + params["be"]).reshape(num_layers, hidden),
        pad_to_h(params["b_h1"]),
        pad_to_h(params["b_h2"]),
    ], axis=0)                                                # (4 + L, H)

    inputs = (
        node_features.astype(jnp.float32),
        edge_features.astype(jnp.float32),
        edge_index.T,                     # (E, 2) layout for gather one-hots
        edge_index,                       # (2, E) layout for scatter one-hot
        params["w_node"], params["w_edge"],
        w_ab, w_e_all, biases,
        params["w_h1"], params["w_h2"],
    )
    vmem_spec = pl.BlockSpec(memory_space=pltpu.MemorySpace.VMEM)
    return pl.pallas_call(
        gnn_forward_kernel,
        out_shape=jax.ShapeDtypeStruct((1, out_dim), jnp.float32),
        in_specs=[vmem_spec] * len(inputs),
        out_specs=vmem_spec,
    )(*inputs)


# ----------------------------- reference (pure JAX) ----------------------------


def reference_forward(node_features, edge_index, edge_features, params):
    relu = lambda a: jnp.maximum(a, 0.0)
    x = relu(node_features @ params["w_node"] + params["b_node"])
    edge_attr = relu(edge_features @ params["w_edge"] + params["b_edge"])
    row, col = edge_index[0], edge_index[1]
    n = x.shape[0]
    for l in range(params["wa"].shape[0]):
        msg = (x[row] @ params["wa"][l] + x[col] @ params["wb"][l] + params["bl"][l]
               + edge_attr @ params["we"][l] + params["be"][l])
        summed = jax.ops.segment_sum(msg, col, num_segments=n)
        counts = jax.ops.segment_sum(jnp.ones((msg.shape[0], 1), jnp.float32),
                                     col, num_segments=n)
        x = relu(jnp.where(counts > 0, summed / jnp.maximum(counts, 1.0), 0.0))
    ge = jnp.mean(x, axis=0, keepdims=True)
    h = relu(ge @ params["w_h1"] + params["b_h1"])
    return h @ params["w_h2"] + params["b_h2"]


# ----------------------------- parameter init ----------------------------------


def init_params(key, node_f, edge_f, hidden, layers, out_dim):
    # Weights stored (in_dim, out_dim) so every kernel matmul is y = x @ W + b.
    # GraphConvLayer.linear (in = 2*hidden) is stored pre-split as Wa / Wb halves.
    def dense(k, fan_in, fan_out, scale=0.1):
        kw, kb = jax.random.split(k)
        w = jax.random.normal(kw, (fan_in, fan_out), jnp.float32) * scale
        b = jax.random.normal(kb, (1, fan_out), jnp.float32) * scale
        return w, b

    keys = jax.random.split(key, 4 + 3 * layers)
    ki = iter(keys)
    w_node, b_node = dense(next(ki), node_f, hidden)
    w_edge, b_edge = dense(next(ki), edge_f, hidden)

    wa, wb, bl, we, be = [], [], [], [], []
    for _ in range(layers):
        wa_l, bl_l = dense(next(ki), hidden, hidden)
        wb_l, _ = dense(next(ki), hidden, hidden)
        we_l, be_l = dense(next(ki), hidden, hidden)
        wa.append(wa_l); wb.append(wb_l); bl.append(bl_l)
        we.append(we_l); be.append(be_l)

    w_h1, b_h1 = dense(next(ki), hidden, hidden // 2)
    w_h2, b_h2 = dense(next(ki), hidden // 2, out_dim)

    return {
        "w_node": w_node, "b_node": b_node,
        "w_edge": w_edge, "b_edge": b_edge,
        "wa": jnp.stack(wa), "wb": jnp.stack(wb), "bl": jnp.stack(bl),
        "we": jnp.stack(we), "be": jnp.stack(be),
        "w_h1": w_h1, "b_h1": b_h1, "w_h2": w_h2, "b_h2": b_h2,
    }


# ----------------------------- main ---------------------------------------------


if __name__ == "__main__":
    N_NODES, N_EDGES = 12, 24
    NODE_F, EDGE_F = 6, 4
    HIDDEN, LAYERS, OUT_DIM = 64, 3, 1     # module defaults: hidden_dim=64, num_layers=3

    key = jax.random.PRNGKey(0)
    k_nodes, k_edges, k_idx, k_params = jax.random.split(key, 4)
    node_features = jax.random.normal(k_nodes, (N_NODES, NODE_F), jnp.float32)
    edge_features = jax.random.normal(k_edges, (N_EDGES, EDGE_F), jnp.float32)
    edge_index = jax.random.randint(k_idx, (2, N_EDGES), 0, N_NODES, dtype=jnp.int32)

    params = init_params(k_params, NODE_F, EDGE_F, HIDDEN, LAYERS, OUT_DIM)

    out = gnn_forward(node_features, edge_index, edge_features, params)
    out = jax.block_until_ready(out)

    assert out.shape == (1, OUT_DIM), out.shape
    assert bool(jnp.all(jnp.isfinite(out)))

    ref = reference_forward(node_features, edge_index, edge_features, params)
    np.testing.assert_allclose(np.asarray(out), np.asarray(ref), rtol=1e-4, atol=1e-4)

    print("KERNEL_OK")
</pallas_src>

<mosaic_0001>
module attributes {stable_mosaic.version = 11 : i64} {
  func.func @gnn_forward_kernel(%arg0: memref<12x6xf32, #tpu.memory_space<vmem>>, %arg1: memref<24x4xf32, #tpu.memory_space<vmem>>, %arg2: memref<24x2xi32, #tpu.memory_space<vmem>>, %arg3: memref<2x24xi32, #tpu.memory_space<vmem>>, %arg4: memref<6x64xf32, #tpu.memory_space<vmem>>, %arg5: memref<4x64xf32, #tpu.memory_space<vmem>>, %arg6: memref<3x64x128xf32, #tpu.memory_space<vmem>>, %arg7: memref<64x192xf32, #tpu.memory_space<vmem>>, %arg8: memref<7x64xf32, #tpu.memory_space<vmem>>, %arg9: memref<64x32xf32, #tpu.memory_space<vmem>>, %arg10: memref<32x1xf32, #tpu.memory_space<vmem>>, %arg11: memref<1x1xf32, #tpu.memory_space<vmem>>) attributes {dimension_semantics = [], scalar_prefetch = 0 : i64, scratch_operands = 0 : i64, tpu.core_type = #tpu.core_type<tc>} {
    %c0 = arith.constant 0 : index
    %c0_0 = arith.constant 0 : index
    %0 = vector.load %arg0[%c0, %c0_0] : memref<12x6xf32, #tpu.memory_space<vmem>>, vector<12x6xf32>
    %c0_1 = arith.constant 0 : index
    %c0_2 = arith.constant 0 : index
    %1 = vector.load %arg1[%c0_1, %c0_2] : memref<24x4xf32, #tpu.memory_space<vmem>>, vector<24x4xf32>
    %c0_3 = arith.constant 0 : index
    %c0_4 = arith.constant 0 : index
    %2 = vector.load %arg4[%c0_3, %c0_4] : memref<6x64xf32, #tpu.memory_space<vmem>>, vector<6x64xf32>
    %cst = arith.constant dense<0.000000e+00> : vector<12x64xf32>
    %3 = tpu.matmul %0, %2, %cst {dimension_numbers = #tpu.dot_dimension_numbers<[1], [0], [0], [1], [0, 0, 1, 1], [], []>} : vector<12x6xf32>, vector<6x64xf32>, vector<12x64xf32> -> vector<12x64xf32>
    %c0_5 = arith.constant 0 : index
    %c0_6 = arith.constant 0 : index
    %4 = vector.load %arg8[%c0_5, %c0_6] : memref<7x64xf32, #tpu.memory_space<vmem>>, vector<1x64xf32>
    %5 = vector.broadcast %4 : vector<1x64xf32> to vector<12x64xf32>
    %6 = arith.addf %3, %5 : vector<12x64xf32>
    %cst_7 = arith.constant 0.000000e+00 : f32
    %7 = vector.broadcast %cst_7 : f32 to vector<12x64xf32>
    %8 = arith.maximumf %6, %7 : vector<12x64xf32>
    %c0_8 = arith.constant 0 : index
    %c0_9 = arith.constant 0 : index
    %9 = vector.load %arg5[%c0_8, %c0_9] : memref<4x64xf32, #tpu.memory_space<vmem>>, vector<4x64xf32>
    %cst_10 = arith.constant dense<0.000000e+00> : vector<24x64xf32>
    %10 = tpu.matmul %1, %9, %cst_10 {dimension_numbers = #tpu.dot_dimension_numbers<[1], [0], [0], [1], [0, 0, 1, 1], [], []>} : vector<24x4xf32>, vector<4x64xf32>, vector<24x64xf32> -> vector<24x64xf32>
    %c1 = arith.constant 1 : index
    %c0_11 = arith.constant 0 : index
    %11 = vector.load %arg8[%c1, %c0_11] : memref<7x64xf32, #tpu.memory_space<vmem>>, vector<1x64xf32>
    %12 = vector.broadcast %11 : vector<1x64xf32> to vector<24x64xf32>
    %13 = arith.addf %10, %12 : vector<24x64xf32>
    %cst_12 = arith.constant 0.000000e+00 : f32
    %14 = vector.broadcast %cst_12 : f32 to vector<24x64xf32>
    %15 = arith.maximumf %13, %14 : vector<24x64xf32>
    %c0_13 = arith.constant 0 : index
    %c0_14 = arith.constant 0 : index
    %16 = vector.load %arg2[%c0_13, %c0_14] : memref<24x2xi32, #tpu.memory_space<vmem>>, vector<24x2xi32>
    %17 = tpu.iota {dimensions = array<i32: 1>} : vector<24x12xi32>
    %18 = vector.extract_strided_slice %16 {offsets = [0, 0], sizes = [24, 1], strides = [1, 1]} : vector<24x2xi32> to vector<24x1xi32>
    %19 = vector.broadcast %18 : vector<24x1xi32> to vector<24x12xi32>
    %20 = arith.cmpi eq, %17, %19 : vector<24x12xi32>
    %21 = arith.extui %20 : vector<24x12xi1> to vector<24x12xi32>
    %22 = arith.sitofp %21 : vector<24x12xi32> to vector<24x12xf32>
    %23 = vector.extract_strided_slice %16 {offsets = [0, 1], sizes = [24, 1], strides = [1, 1]} : vector<24x2xi32> to vector<24x1xi32>
    %24 = vector.broadcast %23 : vector<24x1xi32> to vector<24x12xi32>
    %25 = arith.cmpi eq, %17, %24 : vector<24x12xi32>
    %26 = arith.extui %25 : vector<24x12xi1> to vector<24x12xi32>
    %27 = arith.sitofp %26 : vector<24x12xi32> to vector<24x12xf32>
    %c0_15 = arith.constant 0 : index
    %c0_16 = arith.constant 0 : index
    %28 = vector.load %arg3[%c0_15, %c0_16] : memref<2x24xi32, #tpu.memory_space<vmem>>, vector<2x24xi32>
    %29 = tpu.iota {dimensions = array<i32: 0>} : vector<12x24xi32>
    %30 = vector.extract_strided_slice %28 {offsets = [1, 0], sizes = [1, 24], strides = [1, 1]} : vector<2x24xi32> to vector<1x24xi32>
    %31 = vector.broadcast %30 : vector<1x24xi32> to vector<12x24xi32>
    %32 = arith.cmpi eq, %29, %31 : vector<12x24xi32>
    %33 = arith.extui %32 : vector<12x24xi1> to vector<12x24xi32>
    %34 = arith.sitofp %33 : vector<12x24xi32> to vector<12x24xf32>
    %cst_17 = arith.constant dense<0.000000e+00> : vector<12xf32>
    %35 = vector.multi_reduction <add>, %34, %cst_17 [1] : vector<12x24xf32> to vector<12xf32>
    %36 = vector.shape_cast %35 : vector<12xf32> to vector<12x1xf32>
    %cst_18 = arith.constant 1.000000e+00 : f32
    %37 = vector.broadcast %cst_18 : f32 to vector<12x1xf32>
    %38 = arith.maximumf %36, %37 : vector<12x1xf32>
    %39 = tpu.reciprocal %38 : vector<12x1xf32> -> vector<12x1xf32>
    %40 = vector.broadcast %39 : vector<12x1xf32> to vector<12x24xf32>
    %41 = arith.mulf %34, %40 : vector<12x24xf32>
    %c0_19 = arith.constant 0 : index
    %c0_20 = arith.constant 0 : index
    %42 = vector.load %arg7[%c0_19, %c0_20] : memref<64x192xf32, #tpu.memory_space<vmem>>, vector<64x192xf32>
    %cst_21 = arith.constant dense<0.000000e+00> : vector<24x192xf32>
    %43 = tpu.matmul %15, %42, %cst_21 {dimension_numbers = #tpu.dot_dimension_numbers<[1], [0], [0], [1], [0, 0, 1, 1], [], []>} : vector<24x64xf32>, vector<64x192xf32>, vector<24x192xf32> -> vector<24x192xf32>
    %c0_22 = arith.constant 0 : index
    %c0_23 = arith.constant 0 : index
    %c0_24 = arith.constant 0 : index
    %44 = vector.load %arg6[%c0_22, %c0_23, %c0_24] : memref<3x64x128xf32, #tpu.memory_space<vmem>>, vector<1x64x128xf32>
    %45 = vector.shape_cast %44 : vector<1x64x128xf32> to vector<64x128xf32>
    %cst_25 = arith.constant dense<0.000000e+00> : vector<12x128xf32>
    %46 = tpu.matmul %8, %45, %cst_25 {dimension_numbers = #tpu.dot_dimension_numbers<[1], [0], [0], [1], [0, 0, 1, 1], [], []>} : vector<12x64xf32>, vector<64x128xf32>, vector<12x128xf32> -> vector<12x128xf32>
    %47 = vector.extract_strided_slice %46 {offsets = [0, 0], sizes = [12, 64], strides = [1, 1]} : vector<12x128xf32> to vector<12x64xf32>
    %48 = vector.extract_strided_slice %46 {offsets = [0, 64], sizes = [12, 64], strides = [1, 1]} : vector<12x128xf32> to vector<12x64xf32>
    %cst_26 = arith.constant dense<0.000000e+00> : vector<24x64xf32>
    %49 = tpu.matmul %22, %47, %cst_26 {dimension_numbers = #tpu.dot_dimension_numbers<[1], [0], [0], [1], [0, 0, 1, 1], [], []>} : vector<24x12xf32>, vector<12x64xf32>, vector<24x64xf32> -> vector<24x64xf32>
    %cst_27 = arith.constant dense<0.000000e+00> : vector<24x64xf32>
    %50 = tpu.matmul %27, %48, %cst_27 {dimension_numbers = #tpu.dot_dimension_numbers<[1], [0], [0], [1], [0, 0, 1, 1], [], []>} : vector<24x12xf32>, vector<12x64xf32>, vector<24x64xf32> -> vector<24x64xf32>
    %51 = arith.addf %49, %50 : vector<24x64xf32>
    %52 = vector.extract_strided_slice %43 {offsets = [0, 0], sizes = [24, 64], strides = [1, 1]} : vector<24x192xf32> to vector<24x64xf32>
    %53 = arith.addf %51, %52 : vector<24x64xf32>
    %c2 = arith.constant 2 : index
    %c0_28 = arith.constant 0 : index
    %54 = vector.load %arg8[%c2, %c0_28] : memref<7x64xf32, #tpu.memory_space<vmem>>, vector<1x64xf32>
    %55 = vector.broadcast %54 : vector<1x64xf32> to vector<24x64xf32>
    %56 = arith.addf %53, %55 : vector<24x64xf32>
    %cst_29 = arith.constant dense<0.000000e+00> : vector<12x64xf32>
    %57 = tpu.matmul %41, %56, %cst_29 {dimension_numbers = #tpu.dot_dimension_numbers<[1], [0], [0], [1], [0, 0, 1, 1], [], []>} : vector<12x24xf32>, vector<24x64xf32>, vector<12x64xf32> -> vector<12x64xf32>
    %cst_30 = arith.constant 0.000000e+00 : f32
    %58 = vector.broadcast %cst_30 : f32 to vector<12x64xf32>
    %59 = arith.maximumf %57, %58 : vector<12x64xf32>
    %c1_31 = arith.constant 1 : index
    %c0_32 = arith.constant 0 : index
    %c0_33 = arith.constant 0 : index
    %60 = vector.load %arg6[%c1_31, %c0_32, %c0_33] : memref<3x64x128xf32, #tpu.memory_space<vmem>>, vector<1x64x128xf32>
    %61 = vector.shape_cast %60 : vector<1x64x128xf32> to vector<64x128xf32>
    %cst_34 = arith.constant dense<0.000000e+00> : vector<12x128xf32>
    %62 = tpu.matmul %59, %61, %cst_34 {dimension_numbers = #tpu.dot_dimension_numbers<[1], [0], [0], [1], [0, 0, 1, 1], [], []>} : vector<12x64xf32>, vector<64x128xf32>, vector<12x128xf32> -> vector<12x128xf32>
    %63 = vector.extract_strided_slice %62 {offsets = [0, 0], sizes = [12, 64], strides = [1, 1]} : vector<12x128xf32> to vector<12x64xf32>
    %64 = vector.extract_strided_slice %62 {offsets = [0, 64], sizes = [12, 64], strides = [1, 1]} : vector<12x128xf32> to vector<12x64xf32>
    %cst_35 = arith.constant dense<0.000000e+00> : vector<24x64xf32>
    %65 = tpu.matmul %22, %63, %cst_35 {dimension_numbers = #tpu.dot_dimension_numbers<[1], [0], [0], [1], [0, 0, 1, 1], [], []>} : vector<24x12xf32>, vector<12x64xf32>, vector<24x64xf32> -> vector<24x64xf32>
    %cst_36 = arith.constant dense<0.000000e+00> : vector<24x64xf32>
    %66 = tpu.matmul %27, %64, %cst_36 {dimension_numbers = #tpu.dot_dimension_numbers<[1], [0], [0], [1], [0, 0, 1, 1], [], []>} : vector<24x12xf32>, vector<12x64xf32>, vector<24x64xf32> -> vector<24x64xf32>
    %67 = arith.addf %65, %66 : vector<24x64xf32>
    %68 = vector.extract_strided_slice %43 {offsets = [0, 64], sizes = [24, 64], strides = [1, 1]} : vector<24x192xf32> to vector<24x64xf32>
    %69 = arith.addf %67, %68 : vector<24x64xf32>
    %c3 = arith.constant 3 : index
    %c0_37 = arith.constant 0 : index
    %70 = vector.load %arg8[%c3, %c0_37] : memref<7x64xf32, #tpu.memory_space<vmem>>, vector<1x64xf32>
    %71 = vector.broadcast %70 : vector<1x64xf32> to vector<24x64xf32>
    %72 = arith.addf %69, %71 : vector<24x64xf32>
    %cst_38 = arith.constant dense<0.000000e+00> : vector<12x64xf32>
    %73 = tpu.matmul %41, %72, %cst_38 {dimension_numbers = #tpu.dot_dimension_numbers<[1], [0], [0], [1], [0, 0, 1, 1], [], []>} : vector<12x24xf32>, vector<24x64xf32>, vector<12x64xf32> -> vector<12x64xf32>
    %cst_39 = arith.constant 0.000000e+00 : f32
    %74 = vector.broadcast %cst_39 : f32 to vector<12x64xf32>
    %75 = arith.maximumf %73, %74 : vector<12x64xf32>
    %c2_40 = arith.constant 2 : index
    %c0_41 = arith.constant 0 : index
    %c0_42 = arith.constant 0 : index
    %76 = vector.load %arg6[%c2_40, %c0_41, %c0_42] : memref<3x64x128xf32, #tpu.memory_space<vmem>>, vector<1x64x128xf32>
    %77 = vector.shape_cast %76 : vector<1x64x128xf32> to vector<64x128xf32>
    %cst_43 = arith.constant dense<0.000000e+00> : vector<12x128xf32>
    %78 = tpu.matmul %75, %77, %cst_43 {dimension_numbers = #tpu.dot_dimension_numbers<[1], [0], [0], [1], [0, 0, 1, 1], [], []>} : vector<12x64xf32>, vector<64x128xf32>, vector<12x128xf32> -> vector<12x128xf32>
    %79 = vector.extract_strided_slice %78 {offsets = [0, 0], sizes = [12, 64], strides = [1, 1]} : vector<12x128xf32> to vector<12x64xf32>
    %80 = vector.extract_strided_slice %78 {offsets = [0, 64], sizes = [12, 64], strides = [1, 1]} : vector<12x128xf32> to vector<12x64xf32>
    %cst_44 = arith.constant dense<0.000000e+00> : vector<24x64xf32>
    %81 = tpu.matmul %22, %79, %cst_44 {dimension_numbers = #tpu.dot_dimension_numbers<[1], [0], [0], [1], [0, 0, 1, 1], [], []>} : vector<24x12xf32>, vector<12x64xf32>, vector<24x64xf32> -> vector<24x64xf32>
    %cst_45 = arith.constant dense<0.000000e+00> : vector<24x64xf32>
    %82 = tpu.matmul %27, %80, %cst_45 {dimension_numbers = #tpu.dot_dimension_numbers<[1], [0], [0], [1], [0, 0, 1, 1], [], []>} : vector<24x12xf32>, vector<12x64xf32>, vector<24x64xf32> -> vector<24x64xf32>
    %83 = arith.addf %81, %82 : vector<24x64xf32>
    %84 = vector.extract_strided_slice %43 {offsets = [0, 128], sizes = [24, 64], strides = [1, 1]} : vector<24x192xf32> to vector<24x64xf32>
    %85 = arith.addf %83, %84 : vector<24x64xf32>
    %c4 = arith.constant 4 : index
    %c0_46 = arith.constant 0 : index
    %86 = vector.load %arg8[%c4, %c0_46] : memref<7x64xf32, #tpu.memory_space<vmem>>, vector<1x64xf32>
    %87 = vector.broadcast %86 : vector<1x64xf32> to vector<24x64xf32>
    %88 = arith.addf %85, %87 : vector<24x64xf32>
    %cst_47 = arith.constant dense<0.000000e+00> : vector<12x64xf32>
    %89 = tpu.matmul %41, %88, %cst_47 {dimension_numbers = #tpu.dot_dimension_numbers<[1], [0], [0], [1], [0, 0, 1, 1], [], []>} : vector<12x24xf32>, vector<24x64xf32>, vector<12x64xf32> -> vector<12x64xf32>
    %cst_48 = arith.constant 0.000000e+00 : f32
    %90 = vector.broadcast %cst_48 : f32 to vector<12x64xf32>
    %91 = arith.maximumf %89, %90 : vector<12x64xf32>
    %cst_49 = arith.constant dense<0.000000e+00> : vector<64xf32>
    %92 = vector.multi_reduction <add>, %91, %cst_49 [0] : vector<12x64xf32> to vector<64xf32>
    %93 = vector.shape_cast %92 : vector<64xf32> to vector<1x64xf32>
    %cst_50 = arith.constant 1.200000e+01 : f32
    %94 = vector.broadcast %cst_50 : f32 to vector<1x64xf32>
    %95 = arith.divf %93, %94 : vector<1x64xf32>
    %c5 = arith.constant 5 : index
    %c0_51 = arith.constant 0 : index
    %96 = vector.load %arg8[%c5, %c0_51] : memref<7x64xf32, #tpu.memory_space<vmem>>, vector<1x32xf32>
    %c6 = arith.constant 6 : index
    %c0_52 = arith.constant 0 : index
    %97 = vector.load %arg8[%c6, %c0_52] : memref<7x64xf32, #tpu.memory_space<vmem>>, vector<1x1xf32>
    %c0_53 = arith.constant 0 : index
    %c0_54 = arith.constant 0 : index
    %98 = vector.load %arg9[%c0_53, %c0_54] : memref<64x32xf32, #tpu.memory_space<vmem>>, vector<64x32xf32>
    %cst_55 = arith.constant dense<0.000000e+00> : vector<1x32xf32>
    %99 = tpu.matmul %95, %98, %cst_55 {dimension_numbers = #tpu.dot_dimension_numbers<[1], [0], [0], [1], [0, 0, 1, 1], [], []>} : vector<1x64xf32>, vector<64x32xf32>, vector<1x32xf32> -> vector<1x32xf32>
    %100 = arith.addf %99, %96 : vector<1x32xf32>
    %cst_56 = arith.constant 0.000000e+00 : f32
    %101 = vector.broadcast %cst_56 : f32 to vector<1x32xf32>
    %102 = arith.maximumf %100, %101 : vector<1x32xf32>
    %c0_57 = arith.constant 0 : index
    %c0_58 = arith.constant 0 : index
    %103 = vector.load %arg10[%c0_57, %c0_58] : memref<32x1xf32, #tpu.memory_space<vmem>>, vector<32x1xf32>
    %cst_59 = arith.constant dense<0.000000e+00> : vector<1x1xf32>
    %104 = tpu.matmul %102, %103, %cst_59 {dimension_numbers = #tpu.dot_dimension_numbers<[1], [0], [0], [1], [0, 0, 1, 1], [], []>} : vector<1x32xf32>, vector<32x1xf32>, vector<1x1xf32> -> vector<1x1xf32>
    %105 = arith.addf %104, %97 : vector<1x1xf32>
    %c0_60 = arith.constant 0 : index
    %c0_61 = arith.constant 0 : index
    %106 = vector.load %arg11[%c0_60, %c0_61] : memref<1x1xf32, #tpu.memory_space<vmem>>, vector<1x1xf32>
    tpu.vector_store %arg11[%c0_60, %c0_61], %105 {strides = array<i32>} : memref<1x1xf32, #tpu.memory_space<vmem>>, vector<1x1xf32>,
    return
  }
}

</mosaic_0001>

<llo_original>
// kernel: tpu_custom_call.1
$region0: #{tpu_custom_call.1}
  #allocation0 [shape = 'u32[]', space=smem, size = 0x4, offset = 0x4, fixed_abs, tag = 'smem constant byte address 0x4 - core index']
  #allocation1 [shape = 'u32[144,128]{1,0:T(1,128)}', space=vmem, size = 0x12000, scoped, tag = 'internal scratch']
  %s0 = inlined_call_operand.vmem [shape: f32[12,6], index: 0, kind: input, shape index: {}]
  %s1 = inlined_call_operand.vmem [shape: f32[24,4], index: 1, kind: input, shape index: {}]
  %s2 = inlined_call_operand.vmem [shape: s32[24,2], index: 2, kind: input, shape index: {}]
  %s3 = inlined_call_operand.vmem [shape: s32[2,24], index: 3, kind: input, shape index: {}]
  %s4 = inlined_call_operand.vmem [shape: f32[6,64], index: 4, kind: input, shape index: {}]
  %s5 = inlined_call_operand.vmem [shape: f32[4,64], index: 5, kind: input, shape index: {}]
  %s6 = inlined_call_operand.vmem [shape: f32[3,64,128], index: 6, kind: input, shape index: {}]
  %s7 = inlined_call_operand.hbm [shape: f32[64,192], index: 7, kind: input, shape index: {}]
  %s8 = inlined_call_operand.vmem [shape: f32[7,64], index: 8, kind: input, shape index: {}]
  %s9 = inlined_call_operand.vmem [shape: f32[64,32], index: 9, kind: input, shape index: {}]
  %s10 = inlined_call_operand.vmem [shape: f32[32,1], index: 10, kind: input, shape index: {}]
  %s11 = inlined_call_operand.hbm [shape: f32[1,1], index: 11, kind: output, shape index: {}]
  %s12 = sld [smem:[#allocation0]]
  $region58: #{tpu_custom_call.1} parent=0
    _
  %s14 = ssub.s32 1, %s12
  %s15 = scalar_select 0, %s14, %s12
  $region1: #{tpu_custom_call.1} parent=0
    #allocation2 [shape = 'u8[65536]{0}', space=vmem, size = 0x10000, scoped, tag = 'input window, operand 7, single buffered']
    #allocation3 [shape = 's32[1]{0}', space=sflag, size = 0x4, scoped, tag = 'scoped memory for tpu_custom_call.1']
    #allocation4 [shape = 's32[1]{0}', space=sflag, size = 0x4, scoped, tag = 'scoped memory for tpu_custom_call.1']
    #allocation5 [shape = 'u8[512]{0}', space=vmem, size = 0x400, scoped, tag = 'output window, operand 0, single buffered']
    %16 = vsyncpa [#allocation3], 0
    %17 = vsyncpa [#allocation4], 0
    // Predicated region
    $region2: #{tpu_custom_call.1} parent=1 // pred_check
      _
    $region3: #{tpu_custom_call.1} parent=1 // pred_check_branch
      %19 = sbr.rel (0) target = $region5
    $region4: #{tpu_custom_call.1} parent=1 // pred_region
      _
    $region5: #{tpu_custom_call.1} parent=1 // pred_fallthru
      _
    // Predicated region
    $region6: #{tpu_custom_call.1} parent=1 // pred_check
      _
    $region7: #{tpu_custom_call.1} parent=1 // pred_check_branch
      %21 = sbr.rel (0) target = $region9
    $region8: #{tpu_custom_call.1} parent=1 // pred_region
      _
    $region9: #{tpu_custom_call.1} parent=1 // pred_fallthru
      _
    // Predicated region
    $region10: #{tpu_custom_call.1} parent=1 // pred_check
      _
    $region11: #{tpu_custom_call.1} parent=1 // pred_check_branch
      %23 = sbr.rel (0) target = $region13
    $region12: #{tpu_custom_call.1} parent=1 // pred_region
      _
    $region13: #{tpu_custom_call.1} parent=1 // pred_fallthru
      _
    // Predicated region
    $region14: #{tpu_custom_call.1} parent=1 // pred_check
      _
    $region15: #{tpu_custom_call.1} parent=1 // pred_check_branch
      %25 = sbr.rel (0) target = $region17
    $region16: #{tpu_custom_call.1} parent=1 // pred_region
      _
    $region17: #{tpu_custom_call.1} parent=1 // pred_fallthru
      _
    // Predicated region
    $region18: #{tpu_custom_call.1} parent=1 // pred_check
      _
    $region19: #{tpu_custom_call.1} parent=1 // pred_check_branch
      %27 = sbr.rel (0) target = $region21
    $region20: #{tpu_custom_call.1} parent=1 // pred_region
      _
    $region21: #{tpu_custom_call.1} parent=1 // pred_fallthru
      _
    // Predicated region
    $region22: #{tpu_custom_call.1} parent=1 // pred_check
      _
    $region23: #{tpu_custom_call.1} parent=1 // pred_check_branch
      %29 = sbr.rel (0) target = $region25
    $region24: #{tpu_custom_call.1} parent=1 // pred_region
      _
    $region25: #{tpu_custom_call.1} parent=1 // pred_fallthru
      _
    // Predicated region
    $region26: #{tpu_custom_call.1} parent=1 // pred_check
      _
    $region27: #{tpu_custom_call.1} parent=1 // pred_check_branch
      %31 = sbr.rel (0) target = $region29
    $region28: #{tpu_custom_call.1} parent=1 // pred_region
      _
    $region29: #{tpu_custom_call.1} parent=1 // pred_fallthru
      _
    // Predicated region
    $region30: #{tpu_custom_call.1} parent=1 // pred_check
      _
    $region31: #{tpu_custom_call.1} parent=1 // pred_check_branch
      %33 = sbr.rel (0) target = $region33
    $region32: #{tpu_custom_call.1} parent=1 // pred_region
      %s35 = ssub.s32 2048, 2048
      %36 = vsyncadd [#allocation3], %s35
      %s37 = sshll.u32 [#allocation2], 4
      %s38 = int_to_ptr.vmem [resolvable:$true] %s37
      %43 = dma.hbm_to_vmem [thread:$0]  %s7, 2048, %s38, [#allocation3], 256, 256, 16
    $region33: #{tpu_custom_call.1} parent=1 // pred_fallthru
      _
    // Predicated region
    $region34: #{tpu_custom_call.1} parent=1 // pred_check
      _
    $region35: #{tpu_custom_call.1} parent=1 // pred_check_branch
      %45 = sbr.rel (0) target = $region37
    $region36: #{tpu_custom_call.1} parent=1 // pred_region
      _
    $region37: #{tpu_custom_call.1} parent=1 // pred_fallthru
      _
    // Predicated region
    $region38: #{tpu_custom_call.1} parent=1 // pred_check
      _
    $region39: #{tpu_custom_call.1} parent=1 // pred_check_branch
      %47 = sbr.rel (0) target = $region41
    $region40: #{tpu_custom_call.1} parent=1 // pred_region
      _
    $region41: #{tpu_custom_call.1} parent=1 // pred_fallthru
      _
    // Predicated region
    $region42: #{tpu_custom_call.1} parent=1 // pred_check
      _
    $region43: #{tpu_custom_call.1} parent=1 // pred_check_branch
      %49 = sbr.rel (0) target = $region45
    $region44: #{tpu_custom_call.1} parent=1 // pred_region
      _
    $region45: #{tpu_custom_call.1} parent=1 // pred_fallthru
      _
    // Predicated region
    $region46: #{tpu_custom_call.1} parent=1 // pred_check
      _
    $region47: #{tpu_custom_call.1} parent=1 // pred_check_branch
      %51 = sbr.rel (0) target = $region49
    $region48: #{tpu_custom_call.1} parent=1 // pred_region
      %52 = dma.done [#allocation3], 2048
    $region49: #{tpu_custom_call.1} parent=1 // pred_fallthru
      _
    %v53 = vld [vmem:[%s0] sm:$0xff]
    %v54 = vld [vmem:[%s0 + $0x8] sm:$0xf]
    %v55 = vld [vmem:[%s1] sm:$0xff]
    %v56 = vld [vmem:[%s1 + $0x8] sm:$0xff]
    %v57 = vld [vmem:[%s1 + $0x10] sm:$0xff]
    %v58 = vld [vmem:[%s4] sm:$0x3f]
    %v59 = vld [vmem:[%s8] sm:$0x1]
    %v60 = vlaneseq
    %v61 = vshrl.u32 %v60, 7
    %v62 = vsub.s32 0, %v61
    %v63 = vrot.slane %v59, %v62
    %vm64 = vcmask 48128
    %v66 = vsel %vm64, %v53, 0
    %v69 = vsel %vm64, %v54, 0
    %vm71 = vcmask 1045504
    %v73 = vsel %vm71, %v58, 0
    %75 = vmatprep.subr.mxu0 0.0
    %76 = vmatpush1.msra.mxu0 0.0
    %77 = vmatprep.subr.mxu0 0.0
    %78 = vmatpush1.msra.mxu0 0.0
    %79 = vmatprep.subr.mxu0 0.0
    %80 = vmatpush1.msra.mxu0 0.0
    %81 = vmatprep.subr.mxu0 0.0
    %82 = vmatpush1.msra.mxu0 0.0
    %83 = vmatprep.subr.mxu0 0.0
    %84 = vmatpush1.msra.mxu0 0.0
    %85 = vmatprep.subr.mxu0 0.0
    %86 = vmatpush1.msra.mxu0 0.0
    %87 = vmatprep.subr.mxu0 0.0
    %88 = vmatpush1.msra.mxu0 0.0
    %89 = vmatprep.subr.mxu0 0.0
    %90 = vmatpush1.msra.mxu0 0.0
    %91 = vmatprep.subr.mxu0 0.0
    %92 = vmatpush1.msra.mxu0 0.0
    %93 = vmatprep.subr.mxu0 0.0
    %94 = vmatpush1.msra.mxu0 0.0
    %95 = vmatprep.subr.mxu0 0.0
    %96 = vmatpush1.msra.mxu0 0.0
    %97 = vmatprep.subr.mxu0 0.0
    %98 = vmatpush1.msra.mxu0 0.0
    %99 = vmatprep.subr.mxu0 0.0
    %100 = vmatpush1.msra.mxu0 0.0
    %101 = vmatprep.subr.mxu0 0.0
    %102 = vmatpush1.msra.mxu0 0.0
    %103 = vmatprep.subr.mxu0 0.0
    %104 = vmatpush1.msra.mxu0 0.0
    %105 = vmatprep.subr.mxu0 0.0
    %106 = vmatpush1.msra.mxu0 %v73
    %107 = vmatprep.subr.mxu0 0.0
    %108 = vmatpush2.msra.mxu0 0.0
    %109 = vmatprep.subr.mxu0 0.0
    %110 = vmatpush2.msra.mxu0 0.0
    %111 = vmatprep.subr.mxu0 0.0
    %112 = vmatpush2.msra.mxu0 0.0
    %113 = vmatprep.subr.mxu0 0.0
    %114 = vmatpush2.msra.mxu0 0.0
    %115 = vmatprep.subr.mxu0 0.0
    %116 = vmatpush2.msra.mxu0 0.0
    %117 = vmatprep.subr.mxu0 0.0
    %118 = vmatpush2.msra.mxu0 0.0
    %119 = vmatprep.subr.mxu0 0.0
    %120 = vmatpush2.msra.mxu0 0.0
    %121 = vmatprep.subr.mxu0 0.0
    %122 = vmatpush2.msra.mxu0 0.0
    %123 = vmatprep.subr.mxu0 0.0
    %124 = vmatpush2.msra.mxu0 0.0
    %125 = vmatprep.subr.mxu0 0.0
    %126 = vmatpush2.msra.mxu0 0.0
    %127 = vmatprep.subr.mxu0 0.0
    %128 = vmatpush2.msra.mxu0 0.0
    %129 = vmatprep.subr.mxu0 0.0
    %130 = vmatpush2.msra.mxu0 0.0
    %131 = vmatprep.subr.mxu0 0.0
    %132 = vmatpush2.msra.mxu0 0.0
    %133 = vmatprep.subr.mxu0 0.0
    %134 = vmatpush2.msra.mxu0 0.0
    %135 = vmatprep.subr.mxu0 0.0
    %136 = vmatpush2.msra.mxu0 0.0
    %137 = vmatprep.subr.mxu0 0.0
    %138 = vmatpush2.msra.mxu0 0.0
    %139 = vmatprep.mubr.f32.mxu0 0.0
    %140 = vmatmul.mubr.f32.gmra.mxu0 %v66
    %v141 = vpop.f32.mrf.mxu0
    %v142 = vadd.f32 %v63, %v141
    %v143 = vpop.f32.mrf.mxu0
    %144 = vmatprep.mubr.f32.mxu0 0.0
    %145 = vmatmul.mubr.f32.gmra.mxu0 %v69
    %v146 = vpop.f32.mrf.mxu0
    %v147 = vadd.f32 %v63, %v146
    %v148 = vpop.f32.mrf.mxu0
    %149 = vdwg.mxu0
    %v150 = vmax.f32 %v142, 0.0
    %v151 = vmax.f32 %v147, 0.0
    %v152 = vld [vmem:[%s5] sm:$0xf]
    %v153 = vld [vmem:[%s8 + $0x1] sm:$0x1]
    %v154 = vlaneseq
    %v155 = vshrl.u32 %v154, 7
    %v156 = vsub.s32 0, %v155
    %v157 = vrot.slane %v153, %v156
    %vm158 = vcmask 31744
    %v160 = vsel %vm158, %v55, 0
    %v163 = vsel %vm158, %v56, 0
    %v166 = vsel %vm158, %v57, 0
    %vm168 = vcmask 1043456
    %v170 = vsel %vm168, %v152, 0
    %172 = vmatprep.subr.mxu0 0.0
    %173 = vmatpush1.msra.mxu0 0.0
    %174 = vmatprep.subr.mxu0 0.0
    %175 = vmatpush1.msra.mxu0 0.0
    %176 = vmatprep.subr.mxu0 0.0
    %177 = vmatpush1.msra.mxu0 0.0
    %178 = vmatprep.subr.mxu0 0.0
    %179 = vmatpush1.msra.mxu0 0.0
    %180 = vmatprep.subr.mxu0 0.0
    %181 = vmatpush1.msra.mxu0 0.0
    %182 = vmatprep.subr.mxu0 0.0
    %183 = vmatpush1.msra.mxu0 0.0
    %184 = vmatprep.subr.mxu0 0.0
    %185 = vmatpush1.msra.mxu0 0.0
    %186 = vmatprep.subr.mxu0 0.0
    %187 = vmatpush1.msra.mxu0 0.0
    %188 = vmatprep.subr.mxu0 0.0
    %189 = vmatpush1.msra.mxu0 0.0
    %190 = vmatprep.subr.mxu0 0.0
    %191 = vmatpush1.msra.mxu0 0.0
    %192 = vmatprep.subr.mxu0 0.0
    %193 = vmatpush1.msra.mxu0 0.0
    %194 = vmatprep.subr.mxu0 0.0
    %195 = vmatpush1.msra.mxu0 0.0
    %196 = vmatprep.subr.mxu0 0.0
    %197 = vmatpush1.msra.mxu0 0.0
    %198 = vmatprep.subr.mxu0 0.0
    %199 = vmatpush1.msra.mxu0 0.0
    %200 = vmatprep.subr.mxu0 0.0
    %201 = vmatpush1.msra.mxu0 0.0
    %202 = vmatprep.subr.mxu0 0.0
    %203 = vmatpush1.msra.mxu0 %v170
    %204 = vmatprep.subr.mxu0 0.0
    %205 = vmatpush2.msra.mxu0 0.0
    %206 = vmatprep.subr.mxu0 0.0
    %207 = vmatpush2.msra.mxu0 0.0
    %208 = vmatprep.subr.mxu0 0.0
    %209 = vmatpush2.msra.mxu0 0.0
    %210 = vmatprep.subr.mxu0 0.0
    %211 = vmatpush2.msra.mxu0 0.0
    %212 = vmatprep.subr.mxu0 0.0
    %213 = vmatpush2.msra.mxu0 0.0
    %214 = vmatprep.subr.mxu0 0.0
    %215 = vmatpush2.msra.mxu0 0.0
    %216 = vmatprep.subr.mxu0 0.0
    %217 = vmatpush2.msra.mxu0 0.0
    %218 = vmatprep.subr.mxu0 0.0
    %219 = vmatpush2.msra.mxu0 0.0
    %220 = vmatprep.subr.mxu0 0.0
    %221 = vmatpush2.msra.mxu0 0.0
    %222 = vmatprep.subr.mxu0 0.0
    %223 = vmatpush2.msra.mxu0 0.0
    %224 = vmatprep.subr.mxu0 0.0
    %225 = vmatpush2.msra.mxu0 0.0
    %226 = vmatprep.subr.mxu0 0.0
    %227 = vmatpush2.msra.mxu0 0.0
    %228 = vmatprep.subr.mxu0 0.0
    %229 = vmatpush2.msra.mxu0 0.0
    %230 = vmatprep.subr.mxu0 0.0
    %231 = vmatpush2.msra.mxu0 0.0
    %232 = vmatprep.subr.mxu0 0.0
    %233 = vmatpush2.msra.mxu0 0.0
    %234 = vmatprep.subr.mxu0 0.0
    %235 = vmatpush2.msra.mxu0 0.0
    %236 = vmatprep.mubr.f32.mxu0 0.0
    %237 = vmatmul.mubr.f32.gmra.mxu0 %v160
    %v238 = vpop.f32.mrf.mxu0
    %v239 = vadd.f32 %v157, %v238
    %v240 = vpop.f32.mrf.mxu0
    %241 = vmatprep.mubr.f32.mxu0 0.0
    %242 = vmatmul.mubr.f32.gmra.mxu0 %v163
    %v243 = vpop.f32.mrf.mxu0
    %v244 = vadd.f32 %v157, %v243
    %v245 = vpop.f32.mrf.mxu0
    %246 = vmatprep.mubr.f32.mxu0 0.0
    %247 = vmatmul.mubr.f32.gmra.mxu0 %v166
    %v248 = vpop.f32.mrf.mxu0
    %v249 = vadd.f32 %v157, %v248
    %v250 = vpop.f32.mrf.mxu0
    %251 = vdwg.mxu0
    %v252 = vmax.f32 %v239, 0.0
    %v253 = vmax.f32 %v244, 0.0
    %v254 = vmax.f32 %v249, 0.0
    %v255 = vld [vmem:[%s2] sm:$0xff]
    %v256 = vld [vmem:[%s2 + $0x8] sm:$0xff]
    %v257 = vld [vmem:[%s2 + $0x10] sm:$0xff]
    %v258 = vlaneseq
    %v259 = vand.u32 %v258, 127
    %260 = vset.pattern.permute.xlu0 0
    %261 = vperm.xlu0 %260, %v255
    %v262 = vpop.permute.xlu0 %261
    %263 = vset.pattern.permute.xlu0 0
    %264 = vperm.xlu0 %263, %v256
    %v265 = vpop.permute.xlu0 %264
    %266 = vset.pattern.permute.xlu0 0
    %267 = vperm.xlu0 %266, %v257
    %v268 = vpop.permute.xlu0 %267
    %vm269 = vcmp.eq.s32.totalorder %v259, %v262
    %vm270 = vcmp.eq.s32.totalorder %v259, %v265
    %vm271 = vcmp.eq.s32.totalorder %v259, %v268
    %v272 = vsel %vm269, 1, 0
    %v273 = vsel %vm270, 1, 0
    %v274 = vsel %vm271, 1, 0
    %v275 = vcvt.s32.f32 %v272
    %v276 = vcvt.s32.f32 %v273
    %v277 = vcvt.s32.f32 %v274
    %278 = vset.pattern.permute.xlu0 1
    %279 = vperm.xlu0 %278, %v255
    %v280 = vpop.permute.xlu0 %279
    %281 = vset.pattern.permute.xlu0 1
    %282 = vperm.xlu0 %281, %v256
    %v283 = vpop.permute.xlu0 %282
    %284 = vset.pattern.permute.xlu0 1
    %285 = vperm.xlu0 %284, %v257
    %v286 = vpop.permute.xlu0 %285
    %vm287 = vcmp.eq.s32.totalorder %v259, %v280
    %vm288 = vcmp.eq.s32.totalorder %v259, %v283
    %vm289 = vcmp.eq.s32.totalorder %v259, %v286
    %v290 = vsel %vm287, 1, 0
    %v291 = vsel %vm288, 1, 0
    %v292 = vsel %vm289, 1, 0
    %v293 = vcvt.s32.f32 %v290
    %v294 = vcvt.s32.f32 %v291
    %v295 = vcvt.s32.f32 %v292
    %v296 = vld [vmem:[%s3] sm:$0x3]
    %v297 = vlaneseq
    %v298 = vshrl.u32 %v297, 7
    %v299 = vadd.s32 %v298, 8
    %v300 = vlaneseq
    %v301 = vshrl.u32 %v300, 7
    %v302 = vsub.s32 1, %v301
    %v303 = vrot.slane %v296, %v302
    %vm304 = vcmp.eq.s32.totalorder %v298, %v303
    %vm305 = vcmp.eq.s32.totalorder %v299, %v303
    %v306 = vsel %vm304, 1, 0
    %v307 = vsel %vm305, 1, 0
    %v308 = vcvt.s32.f32 %v306
    %v309 = vcvt.s32.f32 %v307
    %vm310 = vcmask 195584
    %v311 = vsel %vm310, %v308, 0.0
    %312 = vadd.xlane.f32.xlu0 %v311
    %v313 = vpop.xlane.xlu0 %312
    %vm314 = vcmask 191488
    %v315 = vsel %vm314, %v309, 0.0
    %316 = vadd.xlane.f32.xlu0 %v315
    %v317 = vpop.xlane.xlu0 %316
    %v318 = vmax.f32 %v313, 1.0
    %v319 = vmax.f32 %v317, 1.0
    %v320 = vrcp.pop %v318
    %v321 = vrcp.pop %v319
    %v322 = vmul.f32 %v308, %v320
    %v323 = vmul.f32 %v309, %v321
    %v324 = vld [vmem:[#allocation2] sm:$0xff]
    %v325 = vld [vmem:[#allocation2 + $0x8] sm:$0xff]
    %v326 = vld [vmem:[#allocation2 + $0x10] sm:$0xff]
    %v327 = vld [vmem:[#allocation2 + $0x18] sm:$0xff]
    %v328 = vld [vmem:[#allocation2 + $0x20] sm:$0xff]
    %v329 = vld [vmem:[#allocation2 + $0x28] sm:$0xff]
    %v330 = vld [vmem:[#allocation2 + $0x30] sm:$0xff]
    %v331 = vld [vmem:[#allocation2 + $0x38] sm:$0xff]
    %v332 = vld [vmem:[#allocation2 + $0x40] sm:$0xff]
    %v333 = vld [vmem:[#allocation2 + $0x48] sm:$0xff]
    %v334 = vld [vmem:[#allocation2 + $0x50] sm:$0xff]
    %v335 = vld [vmem:[#allocation2 + $0x58] sm:$0xff]
    %v336 = vld [vmem:[#allocation2 + $0x60] sm:$0xff]
    %v337 = vld [vmem:[#allocation2 + $0x68] sm:$0xff]
    %v338 = vld [vmem:[#allocation2 + $0x70] sm:$0xff]
    %v339 = vld [vmem:[#allocation2 + $0x78] sm:$0xff]
    %vm340 = vcmask 523264
    %v342 = vsel %vm340, %v252, 0
    %v345 = vsel %vm340, %v253, 0
    %v348 = vsel %vm340, %v254, 0
    %350 = vmatprep.subr.mxu0 0.0
    %351 = vmatpush1.msra.mxu0 0.0
    %352 = vmatprep.subr.mxu0 0.0
    %353 = vmatpush1.msra.mxu0 0.0
    %354 = vmatprep.subr.mxu0 0.0
    %355 = vmatpush1.msra.mxu0 0.0
    %356 = vmatprep.subr.mxu0 0.0
    %357 = vmatpush1.msra.mxu0 0.0
    %358 = vmatprep.subr.mxu0 0.0
    %359 = vmatpush1.msra.mxu0 0.0
    %360 = vmatprep.subr.mxu0 0.0
    %361 = vmatpush1.msra.mxu0 0.0
    %362 = vmatprep.subr.mxu0 0.0
    %363 = vmatpush1.msra.mxu0 0.0
    %364 = vmatprep.subr.mxu0 0.0
    %365 = vmatpush1.msra.mxu0 0.0
    %366 = vmatprep.subr.mxu0 %v339
    %367 = vmatpush1.msra.mxu0 %v338
    %368 = vmatprep.subr.mxu0 %v337
    %369 = vmatpush1.msra.mxu0 %v336
    %370 = vmatprep.subr.mxu0 %v335
    %371 = vmatpush1.msra.mxu0 %v334
    %372 = vmatprep.subr.mxu0 %v333
    %373 = vmatpush1.msra.mxu0 %v332
    %374 = vmatprep.subr.mxu0 %v331
    %375 = vmatpush1.msra.mxu0 %v330
    %376 = vmatprep.subr.mxu0 %v329
    %377 = vmatpush1.msra.mxu0 %v328
    %378 = vmatprep.subr.mxu0 %v327
    %379 = vmatpush1.msra.mxu0 %v326
    %380 = vmatprep.subr.mxu0 %v325
    %381 = vmatpush1.msra.mxu0 %v324
    %382 = vmatprep.subr.mxu0 0.0
    %383 = vmatpush2.msra.mxu0 0.0
    %384 = vmatprep.subr.mxu0 0.0
    %385 = vmatpush2.msra.mxu0 0.0
    %386 = vmatprep.subr.mxu0 0.0
    %387 = vmatpush2.msra.mxu0 0.0
    %388 = vmatprep.subr.mxu0 0.0
    %389 = vmatpush2.msra.mxu0 0.0
    %390 = vmatprep.subr.mxu0 0.0
    %391 = vmatpush2.msra.mxu0 0.0
    %392 = vmatprep.subr.mxu0 0.0
    %393 = vmatpush2.msra.mxu0 0.0
    %394 = vmatprep.subr.mxu0 0.0
    %395 = vmatpush2.msra.mxu0 0.0
    %396 = vmatprep.subr.mxu0 0.0
    %397 = vmatpush2.msra.mxu0 0.0
    %398 = vmatprep.subr.mxu0 0.0
    %399 = vmatpush2.msra.mxu0 0.0
    %400 = vmatprep.subr.mxu0 0.0
    %401 = vmatpush2.msra.mxu0 0.0
    %402 = vmatprep.subr.mxu0 0.0
    %403 = vmatpush2.msra.mxu0 0.0
    %404 = vmatprep.subr.mxu0 0.0
    %405 = vmatpush2.msra.mxu0 0.0
    %406 = vmatprep.subr.mxu0 0.0
    %407 = vmatpush2.msra.mxu0 0.0
    %408 = vmatprep.subr.mxu0 0.0
    %409 = vmatpush2.msra.mxu0 0.0
    %410 = vmatprep.subr.mxu0 0.0
    %411 = vmatpush2.msra.mxu0 0.0
    %412 = vmatprep.subr.mxu0 0.0
    %413 = vmatpush2.msra.mxu0 0.0
    %414 = vmatprep.mubr.f32.mxu0 0.0
    %415 = vmatmul.mubr.f32.gmra.mxu0 %v342
    %v416 = vpop.f32.mrf.mxu0
    %v417 = vadd.f32 0.0, %v416
    %v418 = vpop.f32.mrf.mxu0
    %v419 = vadd.f32 0.0, %v418
    %420 = vmatprep.mubr.f32.mxu0 0.0
    %421 = vmatmul.mubr.f32.gmra.mxu0 %v345
    %v422 = vpop.f32.mrf.mxu0
    %v423 = vadd.f32 0.0, %v422
    %v424 = vpop.f32.mrf.mxu0
    %v425 = vadd.f32 0.0, %v424
    %426 = vmatprep.mubr.f32.mxu0 0.0
    %427 = vmatmul.mubr.f32.gmra.mxu0 %v348
    %v428 = vpop.f32.mrf.mxu0
    %v429 = vadd.f32 0.0, %v428
    %v430 = vpop.f32.mrf.mxu0
    %v431 = vadd.f32 0.0, %v430
    %432 = vdwg.mxu0
    %v433 = vld [vmem:[%s6] sm:$0xff]
    %v434 = vld [vmem:[%s6 + $0x8] sm:$0xff]
    %v435 = vld [vmem:[%s6 + $0x10] sm:$0xff]
    %v436 = vld [vmem:[%s6 + $0x18] sm:$0xff]
    %v437 = vld [vmem:[%s6 + $0x20] sm:$0xff]
    %v438 = vld [vmem:[%s6 + $0x28] sm:$0xff]
    %v439 = vld [vmem:[%s6 + $0x30] sm:$0xff]
    %v440 = vld [vmem:[%s6 + $0x38] sm:$0xff]
    %v442 = vsel %vm340, %v150, 0
    %v445 = vsel %vm340, %v151, 0
    %447 = vmatprep.subr.mxu0 0.0
    %448 = vmatpush1.msra.mxu0 0.0
    %449 = vmatprep.subr.mxu0 0.0
    %450 = vmatpush1.msra.mxu0 0.0
    %451 = vmatprep.subr.mxu0 0.0
    %452 = vmatpush1.msra.mxu0 0.0
    %453 = vmatprep.subr.mxu0 0.0
    %454 = vmatpush1.msra.mxu0 0.0
    %455 = vmatprep.subr.mxu0 0.0
    %456 = vmatpush1.msra.mxu0 0.0
    %457 = vmatprep.subr.mxu0 0.0
    %458 = vmatpush1.msra.mxu0 0.0
    %459 = vmatprep.subr.mxu0 0.0
    %460 = vmatpush1.msra.mxu0 0.0
    %461 = vmatprep.subr.mxu0 0.0
    %462 = vmatpush1.msra.mxu0 0.0
    %463 = vmatprep.subr.mxu0 0.0
    %464 = vmatpush1.msra.mxu0 %v440
    %465 = vmatprep.subr.mxu0 0.0
    %466 = vmatpush1.msra.mxu0 %v439
    %467 = vmatprep.subr.mxu0 0.0
    %468 = vmatpush1.msra.mxu0 %v438
    %469 = vmatprep.subr.mxu0 0.0
    %470 = vmatpush1.msra.mxu0 %v437
    %471 = vmatprep.subr.mxu0 0.0
    %472 = vmatpush1.msra.mxu0 %v436
    %473 = vmatprep.subr.mxu0 0.0
    %474 = vmatpush1.msra.mxu0 %v435
    %475 = vmatprep.subr.mxu0 0.0
    %476 = vmatpush1.msra.mxu0 %v434
    %477 = vmatprep.subr.mxu0 0.0
    %478 = vmatpush1.msra.mxu0 %v433
    %479 = vmatprep.subr.mxu0 0.0
    %480 = vmatpush2.msra.mxu0 0.0
    %481 = vmatprep.subr.mxu0 0.0
    %482 = vmatpush2.msra.mxu0 0.0
    %483 = vmatprep.subr.mxu0 0.0
    %484 = vmatpush2.msra.mxu0 0.0
    %485 = vmatprep.subr.mxu0 0.0
    %486 = vmatpush2.msra.mxu0 0.0
    %487 = vmatprep.subr.mxu0 0.0
    %488 = vmatpush2.msra.mxu0 0.0
    %489 = vmatprep.subr.mxu0 0.0
    %490 = vmatpush2.msra.mxu0 0.0
    %491 = vmatprep.subr.mxu0 0.0
    %492 = vmatpush2.msra.mxu0 0.0
    %493 = vmatprep.subr.mxu0 0.0
    %494 = vmatpush2.msra.mxu0 0.0
    %495 = vmatprep.subr.mxu0 0.0
    %496 = vmatpush2.msra.mxu0 0.0
    %497 = vmatprep.subr.mxu0 0.0
    %498 = vmatpush2.msra.mxu0 0.0
    %499 = vmatprep.subr.mxu0 0.0
    %500 = vmatpush2.msra.mxu0 0.0
    %501 = vmatprep.subr.mxu0 0.0
    %502 = vmatpush2.msra.mxu0 0.0
    %503 = vmatprep.subr.mxu0 0.0
    %504 = vmatpush2.msra.mxu0 0.0
    %505 = vmatprep.subr.mxu0 0.0
    %506 = vmatpush2.msra.mxu0 0.0
    %507 = vmatprep.subr.mxu0 0.0
    %508 = vmatpush2.msra.mxu0 0.0
    %509 = vmatprep.subr.mxu0 0.0
    %510 = vmatpush2.msra.mxu0 0.0
    %511 = vmatprep.mubr.f32.mxu0 0.0
    %512 = vmatmul.mubr.f32.gmra.mxu0 %v442
    %v513 = vpop.f32.mrf.mxu0
    %v514 = vadd.f32 0.0, %v513
    %v515 = vpop.f32.mrf.mxu0
    %516 = vmatprep.mubr.f32.mxu0 0.0
    %517 = vmatmul.mubr.f32.gmra.mxu0 %v445
    %v518 = vpop.f32.mrf.mxu0
    %v519 = vadd.f32 0.0, %v518
    %v520 = vpop.f32.mrf.mxu0
    %521 = vdwg.mxu0
    %524 = vrot.lane.b32.xlu0 %v514, 64
    %v525 = vpop.permute.xlu0 %524
    %526 = vrot.lane.b32.xlu0 %v519, 64
    %v527 = vpop.permute.xlu0 %526
    %vm529 = vcmask 97280
    %v531 = vsel %vm529, %v293, 0
    %v534 = vsel %vm529, %v294, 0
    %v537 = vsel %vm529, %v295, 0
    %v539 = vsel %vm168, %v527, 0
    %541 = vmatprep.subr.mxu0 0.0
    %542 = vmatpush1.msra.mxu0 0.0
    %543 = vmatprep.subr.mxu0 0.0
    %544 = vmatpush1.msra.mxu0 0.0
    %545 = vmatprep.subr.mxu0 0.0
    %546 = vmatpush1.msra.mxu0 0.0
    %547 = vmatprep.subr.mxu0 0.0
    %548 = vmatpush1.msra.mxu0 0.0
    %549 = vmatprep.subr.mxu0 0.0
    %550 = vmatpush1.msra.mxu0 0.0
    %551 = vmatprep.subr.mxu0 0.0
    %552 = vmatpush1.msra.mxu0 0.0
    %553 = vmatprep.subr.mxu0 0.0
    %554 = vmatpush1.msra.mxu0 0.0
    %555 = vmatprep.subr.mxu0 0.0
    %556 = vmatpush1.msra.mxu0 0.0
    %557 = vmatprep.subr.mxu0 0.0
    %558 = vmatpush1.msra.mxu0 0.0
    %559 = vmatprep.subr.mxu0 0.0
    %560 = vmatpush1.msra.mxu0 0.0
    %561 = vmatprep.subr.mxu0 0.0
    %562 = vmatpush1.msra.mxu0 0.0
    %563 = vmatprep.subr.mxu0 0.0
    %564 = vmatpush1.msra.mxu0 0.0
    %565 = vmatprep.subr.mxu0 0.0
    %566 = vmatpush1.msra.mxu0 0.0
    %567 = vmatprep.subr.mxu0 0.0
    %568 = vmatpush1.msra.mxu0 0.0
    %569 = vmatprep.subr.mxu0 0.0
    %570 = vmatpush1.msra.mxu0 %v539
    %571 = vmatprep.subr.mxu0 0.0
    %572 = vmatpush1.msra.mxu0 %v525
    %573 = vmatprep.subr.mxu0 0.0
    %574 = vmatpush2.msra.mxu0 0.0
    %575 = vmatprep.subr.mxu0 0.0
    %576 = vmatpush2.msra.mxu0 0.0
    %577 = vmatprep.subr.mxu0 0.0
    %578 = vmatpush2.msra.mxu0 0.0
    %579 = vmatprep.subr.mxu0 0.0
    %580 = vmatpush2.msra.mxu0 0.0
    %581 = vmatprep.subr.mxu0 0.0
    %582 = vmatpush2.msra.mxu0 0.0
    %583 = vmatprep.subr.mxu0 0.0
    %584 = vmatpush2.msra.mxu0 0.0
    %585 = vmatprep.subr.mxu0 0.0
    %586 = vmatpush2.msra.mxu0 0.0
    %587 = vmatprep.subr.mxu0 0.0
    %588 = vmatpush2.msra.mxu0 0.0
    %589 = vmatprep.subr.mxu0 0.0
    %590 = vmatpush2.msra.mxu0 0.0
    %591 = vmatprep.subr.mxu0 0.0
    %592 = vmatpush2.msra.mxu0 0.0
    %593 = vmatprep.subr.mxu0 0.0
    %594 = vmatpush2.msra.mxu0 0.0
    %595 = vmatprep.subr.mxu0 0.0
    %596 = vmatpush2.msra.mxu0 0.0
    %597 = vmatprep.subr.mxu0 0.0
    %598 = vmatpush2.msra.mxu0 0.0
    %599 = vmatprep.subr.mxu0 0.0
    %600 = vmatpush2.msra.mxu0 0.0
    %601 = vmatprep.subr.mxu0 0.0
    %602 = vmatpush2.msra.mxu0 0.0
    %603 = vmatprep.subr.mxu0 0.0
    %604 = vmatpush2.msra.mxu0 0.0
    %605 = vmatprep.mubr.f32.mxu0 0.0
    %606 = vmatmul.mubr.f32.gmra.mxu0 %v531
    %v607 = vpop.f32.mrf.mxu0
    %v608 = vadd.f32 0.0, %v607
    %v609 = vpop.f32.mrf.mxu0
    %610 = vmatprep.mubr.f32.mxu0 0.0
    %611 = vmatmul.mubr.f32.gmra.mxu0 %v534
    %v612 = vpop.f32.mrf.mxu0
    %v613 = vadd.f32 0.0, %v612
    %v614 = vpop.f32.mrf.mxu0
    %615 = vmatprep.mubr.f32.mxu0 0.0
    %616 = vmatmul.mubr.f32.gmra.mxu0 %v537
    %v617 = vpop.f32.mrf.mxu0
    %v618 = vadd.f32 0.0, %v617
    %v619 = vpop.f32.mrf.mxu0
    %620 = vdwg.mxu0
    %v622 = vsel %vm529, %v275, 0
    %v625 = vsel %vm529, %v276, 0
    %v628 = vsel %vm529, %v277, 0
    %v630 = vsel %vm168, %v519, 0
    %632 = vmatprep.subr.mxu0 0.0
    %633 = vmatpush1.msra.mxu0 0.0
    %634 = vmatprep.subr.mxu0 0.0
    %635 = vmatpush1.msra.mxu0 0.0
    %636 = vmatprep.subr.mxu0 0.0
    %637 = vmatpush1.msra.mxu0 0.0
    %638 = vmatprep.subr.mxu0 0.0
    %639 = vmatpush1.msra.mxu0 0.0
    %640 = vmatprep.subr.mxu0 0.0
    %641 = vmatpush1.msra.mxu0 0.0
    %642 = vmatprep.subr.mxu0 0.0
    %643 = vmatpush1.msra.mxu0 0.0
    %644 = vmatprep.subr.mxu0 0.0
    %645 = vmatpush1.msra.mxu0 0.0
    %646 = vmatprep.subr.mxu0 0.0
    %647 = vmatpush1.msra.mxu0 0.0
    %648 = vmatprep.subr.mxu0 0.0
    %649 = vmatpush1.msra.mxu0 0.0
    %650 = vmatprep.subr.mxu0 0.0
    %651 = vmatpush1.msra.mxu0 0.0
    %652 = vmatprep.subr.mxu0 0.0
    %653 = vmatpush1.msra.mxu0 0.0
    %654 = vmatprep.subr.mxu0 0.0
    %655 = vmatpush1.msra.mxu0 0.0
    %656 = vmatprep.subr.mxu0 0.0
    %657 = vmatpush1.msra.mxu0 0.0
    %658 = vmatprep.subr.mxu0 0.0
    %659 = vmatpush1.msra.mxu0 0.0
    %660 = vmatprep.subr.mxu0 0.0
    %661 = vmatpush1.msra.mxu0 %v630
    %662 = vmatprep.subr.mxu0 0.0
    %663 = vmatpush1.msra.mxu0 %v514
    %664 = vmatprep.subr.mxu0 0.0
    %665 = vmatpush2.msra.mxu0 0.0
    %666 = vmatprep.subr.mxu0 0.0
    %667 = vmatpush2.msra.mxu0 0.0
    %668 = vmatprep.subr.mxu0 0.0
    %669 = vmatpush2.msra.mxu0 0.0
    %670 = vmatprep.subr.mxu0 0.0
    %671 = vmatpush2.msra.mxu0 0.0
    %672 = vmatprep.subr.mxu0 0.0
    %673 = vmatpush2.msra.mxu0 0.0
    %674 = vmatprep.subr.mxu0 0.0
    %675 = vmatpush2.msra.mxu0 0.0
    %676 = vmatprep.subr.mxu0 0.0
    %677 = vmatpush2.msra.mxu0 0.0
    %678 = vmatprep.subr.mxu0 0.0
    %679 = vmatpush2.msra.mxu0 0.0
    %680 = vmatprep.subr.mxu0 0.0
    %681 = vmatpush2.msra.mxu0 0.0
    %682 = vmatprep.subr.mxu0 0.0
    %683 = vmatpush2.msra.mxu0 0.0
    %684 = vmatprep.subr.mxu0 0.0
    %685 = vmatpush2.msra.mxu0 0.0
    %686 = vmatprep.subr.mxu0 0.0
    %687 = vmatpush2.msra.mxu0 0.0
    %688 = vmatprep.subr.mxu0 0.0
    %689 = vmatpush2.msra.mxu0 0.0
    %690 = vmatprep.subr.mxu0 0.0
    %691 = vmatpush2.msra.mxu0 0.0
    %692 = vmatprep.subr.mxu0 0.0
    %693 = vmatpush2.msra.mxu0 0.0
    %694 = vmatprep.subr.mxu0 0.0
    %695 = vmatpush2.msra.mxu0 0.0
    %696 = vmatprep.mubr.f32.mxu0 0.0
    %697 = vmatmul.mubr.f32.gmra.mxu0 %v622
    %v698 = vpop.f32.mrf.mxu0
    %v699 = vadd.f32 %v608, %v698
    %v700 = vpop.f32.mrf.mxu0
    %701 = vmatprep.mubr.f32.mxu0 0.0
    %702 = vmatmul.mubr.f32.gmra.mxu0 %v625
    %v703 = vpop.f32.mrf.mxu0
    %v704 = vadd.f32 %v613, %v703
    %v705 = vpop.f32.mrf.mxu0
    %706 = vmatprep.mubr.f32.mxu0 0.0
    %707 = vmatmul.mubr.f32.gmra.mxu0 %v628
    %v708 = vpop.f32.mrf.mxu0
    %v709 = vadd.f32 %v618, %v708
    %v710 = vpop.f32.mrf.mxu0
    %711 = vdwg.mxu0
    %v712 = vadd.f32 %v699, %v417
    %v713 = vadd.f32 %v704, %v423
    %v714 = vadd.f32 %v709, %v429
    %v715 = vld [vmem:[%s8 + $0x2] sm:$0x1]
    %v716 = vlaneseq
    %v717 = vshrl.u32 %v716, 7
    %v718 = vsub.s32 0, %v717
    %v719 = vrot.slane %v715, %v718
    %v720 = vadd.f32 %v712, %v719
    %v721 = vadd.f32 %v713, %v719
    %v722 = vadd.f32 %v714, %v719
    %v724 = vsel %vm310, %v322, 0
    %v727 = vsel %vm310, %v323, 0
    %729 = vmatprep.subr.mxu0 0.0
    %730 = vmatpush1.msra.mxu0 0.0
    %731 = vmatprep.subr.mxu0 0.0
    %732 = vmatpush1.msra.mxu0 0.0
    %733 = vmatprep.subr.mxu0 0.0
    %734 = vmatpush1.msra.mxu0 0.0
    %735 = vmatprep.subr.mxu0 0.0
    %736 = vmatpush1.msra.mxu0 0.0
    %737 = vmatprep.subr.mxu0 0.0
    %738 = vmatpush1.msra.mxu0 0.0
    %739 = vmatprep.subr.mxu0 0.0
    %740 = vmatpush1.msra.mxu0 0.0
    %741 = vmatprep.subr.mxu0 0.0
    %742 = vmatpush1.msra.mxu0 0.0
    %743 = vmatprep.subr.mxu0 0.0
    %744 = vmatpush1.msra.mxu0 0.0
    %745 = vmatprep.subr.mxu0 0.0
    %746 = vmatpush1.msra.mxu0 0.0
    %747 = vmatprep.subr.mxu0 0.0
    %748 = vmatpush1.msra.mxu0 0.0
    %749 = vmatprep.subr.mxu0 0.0
    %750 = vmatpush1.msra.mxu0 0.0
    %751 = vmatprep.subr.mxu0 0.0
    %752 = vmatpush1.msra.mxu0 0.0
    %753 = vmatprep.subr.mxu0 0.0
    %754 = vmatpush1.msra.mxu0 0.0
    %755 = vmatprep.subr.mxu0 0.0
    %756 = vmatpush1.msra.mxu0 %v722
    %757 = vmatprep.subr.mxu0 0.0
    %758 = vmatpush1.msra.mxu0 %v721
    %759 = vmatprep.subr.mxu0 0.0
    %760 = vmatpush1.msra.mxu0 %v720
    %761 = vmatprep.subr.mxu0 0.0
    %762 = vmatpush2.msra.mxu0 0.0
    %763 = vmatprep.subr.mxu0 0.0
    %764 = vmatpush2.msra.mxu0 0.0
    %765 = vmatprep.subr.mxu0 0.0
    %766 = vmatpush2.msra.mxu0 0.0
    %767 = vmatprep.subr.mxu0 0.0
    %768 = vmatpush2.msra.mxu0 0.0
    %769 = vmatprep.subr.mxu0 0.0
    %770 = vmatpush2.msra.mxu0 0.0
    %771 = vmatprep.subr.mxu0 0.0
    %772 = vmatpush2.msra.mxu0 0.0
    %773 = vmatprep.subr.mxu0 0.0
    %774 = vmatpush2.msra.mxu0 0.0
    %775 = vmatprep.subr.mxu0 0.0
    %776 = vmatpush2.msra.mxu0 0.0
    %777 = vmatprep.subr.mxu0 0.0
    %778 = vmatpush2.msra.mxu0 0.0
    %779 = vmatprep.subr.mxu0 0.0
    %780 = vmatpush2.msra.mxu0 0.0
    %781 = vmatprep.subr.mxu0 0.0
    %782 = vmatpush2.msra.mxu0 0.0
    %783 = vmatprep.subr.mxu0 0.0
    %784 = vmatpush2.msra.mxu0 0.0
    %785 = vmatprep.subr.mxu0 0.0
    %786 = vmatpush2.msra.mxu0 0.0
    %787 = vmatprep.subr.mxu0 0.0
    %788 = vmatpush2.msra.mxu0 0.0
    %789 = vmatprep.subr.mxu0 0.0
    %790 = vmatpush2.msra.mxu0 0.0
    %791 = vmatprep.subr.mxu0 0.0
    %792 = vmatpush2.msra.mxu0 0.0
    %793 = vmatprep.mubr.f32.mxu0 0.0
    %794 = vmatmul.mubr.f32.gmra.mxu0 %v724
    %v795 = vpop.f32.mrf.mxu0
    %v796 = vadd.f32 0.0, %v795
    %v797 = vpop.f32.mrf.mxu0
    %798 = vmatprep.mubr.f32.mxu0 0.0
    %799 = vmatmul.mubr.f32.gmra.mxu0 %v727
    %v800 = vpop.f32.mrf.mxu0
    %v801 = vadd.f32 0.0, %v800
    %v802 = vpop.f32.mrf.mxu0
    %803 = vdwg.mxu0
    %v804 = vmax.f32 %v796, 0.0
    %v805 = vmax.f32 %v801, 0.0
    %s806 = scalar_lea.vmem %s6, 64
    %v807 = vld [vmem:[%s806] sm:$0xff]
    %v808 = vld [vmem:[%s806 + $0x8] sm:$0xff]
    %v809 = vld [vmem:[%s806 + $0x10] sm:$0xff]
    %v810 = vld [vmem:[%s806 + $0x18] sm:$0xff]
    %v811 = vld [vmem:[%s806 + $0x20] sm:$0xff]
    %v812 = vld [vmem:[%s806 + $0x28] sm:$0xff]
    %v813 = vld [vmem:[%s806 + $0x30] sm:$0xff]
    %v814 = vld [vmem:[%s806 + $0x38] sm:$0xff]
    %v816 = vsel %vm340, %v804, 0
    %v819 = vsel %vm340, %v805, 0
    %821 = vmatprep.subr.mxu0 0.0
    %822 = vmatpush1.msra.mxu0 0.0
    %823 = vmatprep.subr.mxu0 0.0
    %824 = vmatpush1.msra.mxu0 0.0
    %825 = vmatprep.subr.mxu0 0.0
    %826 = vmatpush1.msra.mxu0 0.0
    %827 = vmatprep.subr.mxu0 0.0
    %828 = vmatpush1.msra.mxu0 0.0
    %829 = vmatprep.subr.mxu0 0.0
    %830 = vmatpush1.msra.mxu0 0.0
    %831 = vmatprep.subr.mxu0 0.0
    %832 = vmatpush1.msra.mxu0 0.0
    %833 = vmatprep.subr.mxu0 0.0
    %834 = vmatpush1.msra.mxu0 0.0
    %835 = vmatprep.subr.mxu0 0.0
    %836 = vmatpush1.msra.mxu0 0.0
    %837 = vmatprep.subr.mxu0 0.0
    %838 = vmatpush1.msra.mxu0 %v814
    %839 = vmatprep.subr.mxu0 0.0
    %840 = vmatpush1.msra.mxu0 %v813
    %841 = vmatprep.subr.mxu0 0.0
    %842 = vmatpush1.msra.mxu0 %v812
    %843 = vmatprep.subr.mxu0 0.0
    %844 = vmatpush1.msra.mxu0 %v811
    %845 = vmatprep.subr.mxu0 0.0
    %846 = vmatpush1.msra.mxu0 %v810
    %847 = vmatprep.subr.mxu0 0.0
    %848 = vmatpush1.msra.mxu0 %v809
    %849 = vmatprep.subr.mxu0 0.0
    %850 = vmatpush1.msra.mxu0 %v808
    %851 = vmatprep.subr.mxu0 0.0
    %852 = vmatpush1.msra.mxu0 %v807
    %853 = vmatprep.subr.mxu0 0.0
    %854 = vmatpush2.msra.mxu0 0.0
    %855 = vmatprep.subr.mxu0 0.0
    %856 = vmatpush2.msra.mxu0 0.0
    %857 = vmatprep.subr.mxu0 0.0
    %858 = vmatpush2.msra.mxu0 0.0
    %859 = vmatprep.subr.mxu0 0.0
    %860 = vmatpush2.msra.mxu0 0.0
    %861 = vmatprep.subr.mxu0 0.0
    %862 = vmatpush2.msra.mxu0 0.0
    %863 = vmatprep.subr.mxu0 0.0
    %864 = vmatpush2.msra.mxu0 0.0
    %865 = vmatprep.subr.mxu0 0.0
    %866 = vmatpush2.msra.mxu0 0.0
    %867 = vmatprep.subr.mxu0 0.0
    %868 = vmatpush2.msra.mxu0 0.0
    %869 = vmatprep.subr.mxu0 0.0
    %870 = vmatpush2.msra.mxu0 0.0
    %871 = vmatprep.subr.mxu0 0.0
    %872 = vmatpush2.msra.mxu0 0.0
    %873 = vmatprep.subr.mxu0 0.0
    %874 = vmatpush2.msra.mxu0 0.0
    %875 = vmatprep.subr.mxu0 0.0
    %876 = vmatpush2.msra.mxu0 0.0
    %877 = vmatprep.subr.mxu0 0.0
    %878 = vmatpush2.msra.mxu0 0.0
    %879 = vmatprep.subr.mxu0 0.0
    %880 = vmatpush2.msra.mxu0 0.0
    %881 = vmatprep.subr.mxu0 0.0
    %882 = vmatpush2.msra.mxu0 0.0
    %883 = vmatprep.subr.mxu0 0.0
    %884 = vmatpush2.msra.mxu0 0.0
    %885 = vmatprep.mubr.f32.mxu0 0.0
    %886 = vmatmul.mubr.f32.gmra.mxu0 %v816
    %v887 = vpop.f32.mrf.mxu0
    %v888 = vadd.f32 0.0, %v887
    %v889 = vpop.f32.mrf.mxu0
    %890 = vmatprep.mubr.f32.mxu0 0.0
    %891 = vmatmul.mubr.f32.gmra.mxu0 %v819
    %v892 = vpop.f32.mrf.mxu0
    %v893 = vadd.f32 0.0, %v892
    %v894 = vpop.f32.mrf.mxu0
    %895 = vdwg.mxu0
    %898 = vrot.lane.b32.xlu0 %v888, 64
    %v899 = vpop.permute.xlu0 %898
    %900 = vrot.lane.b32.xlu0 %v893, 64
    %v901 = vpop.permute.xlu0 %900
    %v903 = vsel %vm168, %v901, 0
    %905 = vmatprep.subr.mxu0 0.0
    %906 = vmatpush1.msra.mxu0 0.0
    %907 = vmatprep.subr.mxu0 0.0
    %908 = vmatpush1.msra.mxu0 0.0
    %909 = vmatprep.subr.mxu0 0.0
    %910 = vmatpush1.msra.mxu0 0.0
    %911 = vmatprep.subr.mxu0 0.0
    %912 = vmatpush1.msra.mxu0 0.0
    %913 = vmatprep.subr.mxu0 0.0
    %914 = vmatpush1.msra.mxu0 0.0
    %915 = vmatprep.subr.mxu0 0.0
    %916 = vmatpush1.msra.mxu0 0.0
    %917 = vmatprep.subr.mxu0 0.0
    %918 = vmatpush1.msra.mxu0 0.0
    %919 = vmatprep.subr.mxu0 0.0
    %920 = vmatpush1.msra.mxu0 0.0
    %921 = vmatprep.subr.mxu0 0.0
    %922 = vmatpush1.msra.mxu0 0.0
    %923 = vmatprep.subr.mxu0 0.0
    %924 = vmatpush1.msra.mxu0 0.0
    %925 = vmatprep.subr.mxu0 0.0
    %926 = vmatpush1.msra.mxu0 0.0
    %927 = vmatprep.subr.mxu0 0.0
    %928 = vmatpush1.msra.mxu0 0.0
    %929 = vmatprep.subr.mxu0 0.0
    %930 = vmatpush1.msra.mxu0 0.0
    %931 = vmatprep.subr.mxu0 0.0
    %932 = vmatpush1.msra.mxu0 0.0
    %933 = vmatprep.subr.mxu0 0.0
    %934 = vmatpush1.msra.mxu0 %v903
    %935 = vmatprep.subr.mxu0 0.0
    %936 = vmatpush1.msra.mxu0 %v899
    %937 = vmatprep.subr.mxu0 0.0
    %938 = vmatpush2.msra.mxu0 0.0
    %939 = vmatprep.subr.mxu0 0.0
    %940 = vmatpush2.msra.mxu0 0.0
    %941 = vmatprep.subr.mxu0 0.0
    %942 = vmatpush2.msra.mxu0 0.0
    %943 = vmatprep.subr.mxu0 0.0
    %944 = vmatpush2.msra.mxu0 0.0
    %945 = vmatprep.subr.mxu0 0.0
    %946 = vmatpush2.msra.mxu0 0.0
    %947 = vmatprep.subr.mxu0 0.0
    %948 = vmatpush2.msra.mxu0 0.0
    %949 = vmatprep.subr.mxu0 0.0
    %950 = vmatpush2.msra.mxu0 0.0
    %951 = vmatprep.subr.mxu0 0.0
    %952 = vmatpush2.msra.mxu0 0.0
    %953 = vmatprep.subr.mxu0 0.0
    %954 = vmatpush2.msra.mxu0 0.0
    %955 = vmatprep.subr.mxu0 0.0
    %956 = vmatpush2.msra.mxu0 0.0
    %957 = vmatprep.subr.mxu0 0.0
    %958 = vmatpush2.msra.mxu0 0.0
    %959 = vmatprep.subr.mxu0 0.0
    %960 = vmatpush2.msra.mxu0 0.0
    %961 = vmatprep.subr.mxu0 0.0
    %962 = vmatpush2.msra.mxu0 0.0
    %963 = vmatprep.subr.mxu0 0.0
    %964 = vmatpush2.msra.mxu0 0.0
    %965 = vmatprep.subr.mxu0 0.0
    %966 = vmatpush2.msra.mxu0 0.0
    %967 = vmatprep.subr.mxu0 0.0
    %968 = vmatpush2.msra.mxu0 0.0
    %969 = vmatprep.mubr.f32.mxu0 0.0
    %970 = vmatmul.mubr.f32.gmra.mxu0 %v531
    %v971 = vpop.f32.mrf.mxu0
    %v972 = vadd.f32 0.0, %v971
    %v973 = vpop.f32.mrf.mxu0
    %974 = vmatprep.mubr.f32.mxu0 0.0
    %975 = vmatmul.mubr.f32.gmra.mxu0 %v534
    %v976 = vpop.f32.mrf.mxu0
    %v977 = vadd.f32 0.0, %v976
    %v978 = vpop.f32.mrf.mxu0
    %979 = vmatprep.mubr.f32.mxu0 0.0
    %980 = vmatmul.mubr.f32.gmra.mxu0 %v537
    %v981 = vpop.f32.mrf.mxu0
    %v982 = vadd.f32 0.0, %v981
    %v983 = vpop.f32.mrf.mxu0
    %984 = vdwg.mxu0
    %v985 = vsel %vm168, %v893, 0
    %987 = vmatprep.subr.mxu0 0.0
    %988 = vmatpush1.msra.mxu0 0.0
    %989 = vmatprep.subr.mxu0 0.0
    %990 = vmatpush1.msra.mxu0 0.0
    %991 = vmatprep.subr.mxu0 0.0
    %992 = vmatpush1.msra.mxu0 0.0
    %993 = vmatprep.subr.mxu0 0.0
    %994 = vmatpush1.msra.mxu0 0.0
    %995 = vmatprep.subr.mxu0 0.0
    %996 = vmatpush1.msra.mxu0 0.0
    %997 = vmatprep.subr.mxu0 0.0
    %998 = vmatpush1.msra.mxu0 0.0
    %999 = vmatprep.subr.mxu0 0.0
    %1000 = vmatpush1.msra.mxu0 0.0
    %1001 = vmatprep.subr.mxu0 0.0
    %1002 = vmatpush1.msra.mxu0 0.0
    %1003 = vmatprep.subr.mxu0 0.0
    %1004 = vmatpush1.msra.mxu0 0.0
    %1005 = vmatprep.subr.mxu0 0.0
    %1006 = vmatpush1.msra.mxu0 0.0
    %1007 = vmatprep.subr.mxu0 0.0
    %1008 = vmatpush1.msra.mxu0 0.0
    %1009 = vmatprep.subr.mxu0 0.0
    %1010 = vmatpush1.msra.mxu0 0.0
    %1011 = vmatprep.subr.mxu0 0.0
    %1012 = vmatpush1.msra.mxu0 0.0
    %1013 = vmatprep.subr.mxu0 0.0
    %1014 = vmatpush1.msra.mxu0 0.0
    %1015 = vmatprep.subr.mxu0 0.0
    %1016 = vmatpush1.msra.mxu0 %v985
    %1017 = vmatprep.subr.mxu0 0.0
    %1018 = vmatpush1.msra.mxu0 %v888
    %1019 = vmatprep.subr.mxu0 0.0
    %1020 = vmatpush2.msra.mxu0 0.0
    %1021 = vmatprep.subr.mxu0 0.0
    %1022 = vmatpush2.msra.mxu0 0.0
    %1023 = vmatprep.subr.mxu0 0.0
    %1024 = vmatpush2.msra.mxu0 0.0
    %1025 = vmatprep.subr.mxu0 0.0
    %1026 = vmatpush2.msra.mxu0 0.0
    %1027 = vmatprep.subr.mxu0 0.0
    %1028 = vmatpush2.msra.mxu0 0.0
    %1029 = vmatprep.subr.mxu0 0.0
    %1030 = vmatpush2.msra.mxu0 0.0
    %1031 = vmatprep.subr.mxu0 0.0
    %1032 = vmatpush2.msra.mxu0 0.0
    %1033 = vmatprep.subr.mxu0 0.0
    %1034 = vmatpush2.msra.mxu0 0.0
    %1035 = vmatprep.subr.mxu0 0.0
    %1036 = vmatpush2.msra.mxu0 0.0
    %1037 = vmatprep.subr.mxu0 0.0
    %1038 = vmatpush2.msra.mxu0 0.0
    %1039 = vmatprep.subr.mxu0 0.0
    %1040 = vmatpush2.msra.mxu0 0.0
    %1041 = vmatprep.subr.mxu0 0.0
    %1042 = vmatpush2.msra.mxu0 0.0
    %1043 = vmatprep.subr.mxu0 0.0
    %1044 = vmatpush2.msra.mxu0 0.0
    %1045 = vmatprep.subr.mxu0 0.0
    %1046 = vmatpush2.msra.mxu0 0.0
    %1047 = vmatprep.subr.mxu0 0.0
    %1048 = vmatpush2.msra.mxu0 0.0
    %1049 = vmatprep.subr.mxu0 0.0
    %1050 = vmatpush2.msra.mxu0 0.0
    %1051 = vmatprep.mubr.f32.mxu0 0.0
    %1052 = vmatmul.mubr.f32.gmra.mxu0 %v622
    %v1053 = vpop.f32.mrf.mxu0
    %v1054 = vadd.f32 %v972, %v1053
    %v1055 = vpop.f32.mrf.mxu0
    %1056 = vmatprep.mubr.f32.mxu0 0.0
    %1057 = vmatmul.mubr.f32.gmra.mxu0 %v625
    %v1058 = vpop.f32.mrf.mxu0
    %v1059 = vadd.f32 %v977, %v1058
    %v1060 = vpop.f32.mrf.mxu0
    %1061 = vmatprep.mubr.f32.mxu0 0.0
    %1062 = vmatmul.mubr.f32.gmra.mxu0 %v628
    %v1063 = vpop.f32.mrf.mxu0
    %v1064 = vadd.f32 %v982, %v1063
    %v1065 = vpop.f32.mrf.mxu0
    %1066 = vdwg.mxu0
    %1070 = vrot.lane.b32.xlu0 %v417, 64
    %v1071 = vpop.permute.xlu0 %1070
    %1072 = vrot.lane.b32.xlu0 %v423, 64
    %v1073 = vpop.permute.xlu0 %1072
    %1074 = vrot.lane.b32.xlu0 %v429, 64
    %v1075 = vpop.permute.xlu0 %1074
    %v1079 = vadd.f32 %v1054, %v1071
    %v1080 = vadd.f32 %v1059, %v1073
    %v1081 = vadd.f32 %v1064, %v1075
    %v1082 = vld [vmem:[%s8 + $0x3] sm:$0x1]
    %v1083 = vlaneseq
    %v1084 = vshrl.u32 %v1083, 7
    %v1085 = vsub.s32 0, %v1084
    %v1086 = vrot.slane %v1082, %v1085
    %v1087 = vadd.f32 %v1079, %v1086
    %v1088 = vadd.f32 %v1080, %v1086
    %v1089 = vadd.f32 %v1081, %v1086
    %1090 = vmatprep.subr.mxu0 0.0
    %1091 = vmatpush1.msra.mxu0 0.0
    %1092 = vmatprep.subr.mxu0 0.0
    %1093 = vmatpush1.msra.mxu0 0.0
    %1094 = vmatprep.subr.mxu0 0.0
    %1095 = vmatpush1.msra.mxu0 0.0
    %1096 = vmatprep.subr.mxu0 0.0
    %1097 = vmatpush1.msra.mxu0 0.0
    %1098 = vmatprep.subr.mxu0 0.0
    %1099 = vmatpush1.msra.mxu0 0.0
    %1100 = vmatprep.subr.mxu0 0.0
    %1101 = vmatpush1.msra.mxu0 0.0
    %1102 = vmatprep.subr.mxu0 0.0
    %1103 = vmatpush1.msra.mxu0 0.0
    %1104 = vmatprep.subr.mxu0 0.0
    %1105 = vmatpush1.msra.mxu0 0.0
    %1106 = vmatprep.subr.mxu0 0.0
    %1107 = vmatpush1.msra.mxu0 0.0
    %1108 = vmatprep.subr.mxu0 0.0
    %1109 = vmatpush1.msra.mxu0 0.0
    %1110 = vmatprep.subr.mxu0 0.0
    %1111 = vmatpush1.msra.mxu0 0.0
    %1112 = vmatprep.subr.mxu0 0.0
    %1113 = vmatpush1.msra.mxu0 0.0
    %1114 = vmatprep.subr.mxu0 0.0
    %1115 = vmatpush1.msra.mxu0 0.0
    %1116 = vmatprep.subr.mxu0 0.0
    %1117 = vmatpush1.msra.mxu0 %v1089
    %1118 = vmatprep.subr.mxu0 0.0
    %1119 = vmatpush1.msra.mxu0 %v1088
    %1120 = vmatprep.subr.mxu0 0.0
    %1121 = vmatpush1.msra.mxu0 %v1087
    %1122 = vmatprep.subr.mxu0 0.0
    %1123 = vmatpush2.msra.mxu0 0.0
    %1124 = vmatprep.subr.mxu0 0.0
    %1125 = vmatpush2.msra.mxu0 0.0
    %1126 = vmatprep.subr.mxu0 0.0
    %1127 = vmatpush2.msra.mxu0 0.0
    %1128 = vmatprep.subr.mxu0 0.0
    %1129 = vmatpush2.msra.mxu0 0.0
    %1130 = vmatprep.subr.mxu0 0.0
    %1131 = vmatpush2.msra.mxu0 0.0
    %1132 = vmatprep.subr.mxu0 0.0
    %1133 = vmatpush2.msra.mxu0 0.0
    %1134 = vmatprep.subr.mxu0 0.0
    %1135 = vmatpush2.msra.mxu0 0.0
    %1136 = vmatprep.subr.mxu0 0.0
    %1137 = vmatpush2.msra.mxu0 0.0
    %1138 = vmatprep.subr.mxu0 0.0
    %1139 = vmatpush2.msra.mxu0 0.0
    %1140 = vmatprep.subr.mxu0 0.0
    %1141 = vmatpush2.msra.mxu0 0.0
    %1142 = vmatprep.subr.mxu0 0.0
    %1143 = vmatpush2.msra.mxu0 0.0
    %1144 = vmatprep.subr.mxu0 0.0
    %1145 = vmatpush2.msra.mxu0 0.0
    %1146 = vmatprep.subr.mxu0 0.0
    %1147 = vmatpush2.msra.mxu0 0.0
    %1148 = vmatprep.subr.mxu0 0.0
    %1149 = vmatpush2.msra.mxu0 0.0
    %1150 = vmatprep.subr.mxu0 0.0
    %1151 = vmatpush2.msra.mxu0 0.0
    %1152 = vmatprep.subr.mxu0 0.0
    %1153 = vmatpush2.msra.mxu0 0.0
    %1154 = vmatprep.mubr.f32.mxu0 0.0
    %1155 = vmatmul.mubr.f32.gmra.mxu0 %v724
    %v1156 = vpop.f32.mrf.mxu0
    %v1157 = vadd.f32 0.0, %v1156
    %v1158 = vpop.f32.mrf.mxu0
    %1159 = vmatprep.mubr.f32.mxu0 0.0
    %1160 = vmatmul.mubr.f32.gmra.mxu0 %v727
    %v1161 = vpop.f32.mrf.mxu0
    %v1162 = vadd.f32 0.0, %v1161
    %v1163 = vpop.f32.mrf.mxu0
    %1164 = vdwg.mxu0
    %v1165 = vmax.f32 %v1157, 0.0
    %v1166 = vmax.f32 %v1162, 0.0
    %s1167 = scalar_lea.vmem %s6, 128
    %v1168 = vld [vmem:[%s1167] sm:$0xff]
    %v1169 = vld [vmem:[%s1167 + $0x8] sm:$0xff]
    %v1170 = vld [vmem:[%s1167 + $0x10] sm:$0xff]
    %v1171 = vld [vmem:[%s1167 + $0x18] sm:$0xff]
    %v1172 = vld [vmem:[%s1167 + $0x20] sm:$0xff]
    %v1173 = vld [vmem:[%s1167 + $0x28] sm:$0xff]
    %v1174 = vld [vmem:[%s1167 + $0x30] sm:$0xff]
    %v1175 = vld [vmem:[%s1167 + $0x38] sm:$0xff]
    %v1177 = vsel %vm340, %v1165, 0
    %v1180 = vsel %vm340, %v1166, 0
    %1182 = vmatprep.subr.mxu0 0.0
    %1183 = vmatpush1.msra.mxu0 0.0
    %1184 = vmatprep.subr.mxu0 0.0
    %1185 = vmatpush1.msra.mxu0 0.0
    %1186 = vmatprep.subr.mxu0 0.0
    %1187 = vmatpush1.msra.mxu0 0.0
    %1188 = vmatprep.subr.mxu0 0.0
    %1189 = vmatpush1.msra.mxu0 0.0
    %1190 = vmatprep.subr.mxu0 0.0
    %1191 = vmatpush1.msra.mxu0 0.0
    %1192 = vmatprep.subr.mxu0 0.0
    %1193 = vmatpush1.msra.mxu0 0.0
    %1194 = vmatprep.subr.mxu0 0.0
    %1195 = vmatpush1.msra.mxu0 0.0
    %1196 = vmatprep.subr.mxu0 0.0
    %1197 = vmatpush1.msra.mxu0 0.0
    %1198 = vmatprep.subr.mxu0 0.0
    %1199 = vmatpush1.msra.mxu0 %v1175
    %1200 = vmatprep.subr.mxu0 0.0
    %1201 = vmatpush1.msra.mxu0 %v1174
    %1202 = vmatprep.subr.mxu0 0.0
    %1203 = vmatpush1.msra.mxu0 %v1173
    %1204 = vmatprep.subr.mxu0 0.0
    %1205 = vmatpush1.msra.mxu0 %v1172
    %1206 = vmatprep.subr.mxu0 0.0
    %1207 = vmatpush1.msra.mxu0 %v1171
    %1208 = vmatprep.subr.mxu0 0.0
    %1209 = vmatpush1.msra.mxu0 %v1170
    %1210 = vmatprep.subr.mxu0 0.0
    %1211 = vmatpush1.msra.mxu0 %v1169
    %1212 = vmatprep.subr.mxu0 0.0
    %1213 = vmatpush1.msra.mxu0 %v1168
    %1214 = vmatprep.subr.mxu0 0.0
    %1215 = vmatpush2.msra.mxu0 0.0
    %1216 = vmatprep.subr.mxu0 0.0
    %1217 = vmatpush2.msra.mxu0 0.0
    %1218 = vmatprep.subr.mxu0 0.0
    %1219 = vmatpush2.msra.mxu0 0.0
    %1220 = vmatprep.subr.mxu0 0.0
    %1221 = vmatpush2.msra.mxu0 0.0
    %1222 = vmatprep.subr.mxu0 0.0
    %1223 = vmatpush2.msra.mxu0 0.0
    %1224 = vmatprep.subr.mxu0 0.0
    %1225 = vmatpush2.msra.mxu0 0.0
    %1226 = vmatprep.subr.mxu0 0.0
    %1227 = vmatpush2.msra.mxu0 0.0
    %1228 = vmatprep.subr.mxu0 0.0
    %1229 = vmatpush2.msra.mxu0 0.0
    %1230 = vmatprep.subr.mxu0 0.0
    %1231 = vmatpush2.msra.mxu0 0.0
    %1232 = vmatprep.subr.mxu0 0.0
    %1233 = vmatpush2.msra.mxu0 0.0
    %1234 = vmatprep.subr.mxu0 0.0
    %1235 = vmatpush2.msra.mxu0 0.0
    %1236 = vmatprep.subr.mxu0 0.0
    %1237 = vmatpush2.msra.mxu0 0.0
    %1238 = vmatprep.subr.mxu0 0.0
    %1239 = vmatpush2.msra.mxu0 0.0
    %1240 = vmatprep.subr.mxu0 0.0
    %1241 = vmatpush2.msra.mxu0 0.0
    %1242 = vmatprep.subr.mxu0 0.0
    %1243 = vmatpush2.msra.mxu0 0.0
    %1244 = vmatprep.subr.mxu0 0.0
    %1245 = vmatpush2.msra.mxu0 0.0
    %1246 = vmatprep.mubr.f32.mxu0 0.0
    %1247 = vmatmul.mubr.f32.gmra.mxu0 %v1177
    %v1248 = vpop.f32.mrf.mxu0
    %v1249 = vadd.f32 0.0, %v1248
    %v1250 = vpop.f32.mrf.mxu0
    %1251 = vmatprep.mubr.f32.mxu0 0.0
    %1252 = vmatmul.mubr.f32.gmra.mxu0 %v1180
    %v1253 = vpop.f32.mrf.mxu0
    %v1254 = vadd.f32 0.0, %v1253
    %v1255 = vpop.f32.mrf.mxu0
    %1256 = vdwg.mxu0
    %1259 = vrot.lane.b32.xlu0 %v1249, 64
    %v1260 = vpop.permute.xlu0 %1259
    %1261 = vrot.lane.b32.xlu0 %v1254, 64
    %v1262 = vpop.permute.xlu0 %1261
    %v1264 = vsel %vm168, %v1262, 0
    %1266 = vmatprep.subr.mxu0 0.0
    %1267 = vmatpush1.msra.mxu0 0.0
    %1268 = vmatprep.subr.mxu0 0.0
    %1269 = vmatpush1.msra.mxu0 0.0
    %1270 = vmatprep.subr.mxu0 0.0
    %1271 = vmatpush1.msra.mxu0 0.0
    %1272 = vmatprep.subr.mxu0 0.0
    %1273 = vmatpush1.msra.mxu0 0.0
    %1274 = vmatprep.subr.mxu0 0.0
    %1275 = vmatpush1.msra.mxu0 0.0
    %1276 = vmatprep.subr.mxu0 0.0
    %1277 = vmatpush1.msra.mxu0 0.0
    %1278 = vmatprep.subr.mxu0 0.0
    %1279 = vmatpush1.msra.mxu0 0.0
    %1280 = vmatprep.subr.mxu0 0.0
    %1281 = vmatpush1.msra.mxu0 0.0
    %1282 = vmatprep.subr.mxu0 0.0
    %1283 = vmatpush1.msra.mxu0 0.0
    %1284 = vmatprep.subr.mxu0 0.0
    %1285 = vmatpush1.msra.mxu0 0.0
    %1286 = vmatprep.subr.mxu0 0.0
    %1287 = vmatpush1.msra.mxu0 0.0
    %1288 = vmatprep.subr.mxu0 0.0
    %1289 = vmatpush1.msra.mxu0 0.0
    %1290 = vmatprep.subr.mxu0 0.0
    %1291 = vmatpush1.msra.mxu0 0.0
    %1292 = vmatprep.subr.mxu0 0.0
    %1293 = vmatpush1.msra.mxu0 0.0
    %1294 = vmatprep.subr.mxu0 0.0
    %1295 = vmatpush1.msra.mxu0 %v1264
    %1296 = vmatprep.subr.mxu0 0.0
    %1297 = vmatpush1.msra.mxu0 %v1260
    %1298 = vmatprep.subr.mxu0 0.0
    %1299 = vmatpush2.msra.mxu0 0.0
    %1300 = vmatprep.subr.mxu0 0.0
    %1301 = vmatpush2.msra.mxu0 0.0
    %1302 = vmatprep.subr.mxu0 0.0
    %1303 = vmatpush2.msra.mxu0 0.0
    %1304 = vmatprep.subr.mxu0 0.0
    %1305 = vmatpush2.msra.mxu0 0.0
    %1306 = vmatprep.subr.mxu0 0.0
    %1307 = vmatpush2.msra.mxu0 0.0
    %1308 = vmatprep.subr.mxu0 0.0
    %1309 = vmatpush2.msra.mxu0 0.0
    %1310 = vmatprep.subr.mxu0 0.0
    %1311 = vmatpush2.msra.mxu0 0.0
    %1312 = vmatprep.subr.mxu0 0.0
    %1313 = vmatpush2.msra.mxu0 0.0
    %1314 = vmatprep.subr.mxu0 0.0
    %1315 = vmatpush2.msra.mxu0 0.0
    %1316 = vmatprep.subr.mxu0 0.0
    %1317 = vmatpush2.msra.mxu0 0.0
    %1318 = vmatprep.subr.mxu0 0.0
    %1319 = vmatpush2.msra.mxu0 0.0
    %1320 = vmatprep.subr.mxu0 0.0
    %1321 = vmatpush2.msra.mxu0 0.0
    %1322 = vmatprep.subr.mxu0 0.0
    %1323 = vmatpush2.msra.mxu0 0.0
    %1324 = vmatprep.subr.mxu0 0.0
    %1325 = vmatpush2.msra.mxu0 0.0
    %1326 = vmatprep.subr.mxu0 0.0
    %1327 = vmatpush2.msra.mxu0 0.0
    %1328 = vmatprep.subr.mxu0 0.0
    %1329 = vmatpush2.msra.mxu0 0.0
    %1330 = vmatprep.mubr.f32.mxu0 0.0
    %1331 = vmatmul.mubr.f32.gmra.mxu0 %v531
    %v1332 = vpop.f32.mrf.mxu0
    %v1333 = vadd.f32 0.0, %v1332
    %v1334 = vpop.f32.mrf.mxu0
    %1335 = vmatprep.mubr.f32.mxu0 0.0
    %1336 = vmatmul.mubr.f32.gmra.mxu0 %v534
    %v1337 = vpop.f32.mrf.mxu0
    %v1338 = vadd.f32 0.0, %v1337
    %v1339 = vpop.f32.mrf.mxu0
    %1340 = vmatprep.mubr.f32.mxu0 0.0
    %1341 = vmatmul.mubr.f32.gmra.mxu0 %v537
    %v1342 = vpop.f32.mrf.mxu0
    %v1343 = vadd.f32 0.0, %v1342
    %v1344 = vpop.f32.mrf.mxu0
    %1345 = vdwg.mxu0
    %v1346 = vsel %vm168, %v1254, 0
    %1348 = vmatprep.subr.mxu0 0.0
    %1349 = vmatpush1.msra.mxu0 0.0
    %1350 = vmatprep.subr.mxu0 0.0
    %1351 = vmatpush1.msra.mxu0 0.0
    %1352 = vmatprep.subr.mxu0 0.0
    %1353 = vmatpush1.msra.mxu0 0.0
    %1354 = vmatprep.subr.mxu0 0.0
    %1355 = vmatpush1.msra.mxu0 0.0
    %1356 = vmatprep.subr.mxu0 0.0
    %1357 = vmatpush1.msra.mxu0 0.0
    %1358 = vmatprep.subr.mxu0 0.0
    %1359 = vmatpush1.msra.mxu0 0.0
    %1360 = vmatprep.subr.mxu0 0.0
    %1361 = vmatpush1.msra.mxu0 0.0
    %1362 = vmatprep.subr.mxu0 0.0
    %1363 = vmatpush1.msra.mxu0 0.0
    %1364 = vmatprep.subr.mxu0 0.0
    %1365 = vmatpush1.msra.mxu0 0.0
    %1366 = vmatprep.subr.mxu0 0.0
    %1367 = vmatpush1.msra.mxu0 0.0
    %1368 = vmatprep.subr.mxu0 0.0
    %1369 = vmatpush1.msra.mxu0 0.0
    %1370 = vmatprep.subr.mxu0 0.0
    %1371 = vmatpush1.msra.mxu0 0.0
    %1372 = vmatprep.subr.mxu0 0.0
    %1373 = vmatpush1.msra.mxu0 0.0
    %1374 = vmatprep.subr.mxu0 0.0
    %1375 = vmatpush1.msra.mxu0 0.0
    %1376 = vmatprep.subr.mxu0 0.0
    %1377 = vmatpush1.msra.mxu0 %v1346
    %1378 = vmatprep.subr.mxu0 0.0
    %1379 = vmatpush1.msra.mxu0 %v1249
    %1380 = vmatprep.subr.mxu0 0.0
    %1381 = vmatpush2.msra.mxu0 0.0
    %1382 = vmatprep.subr.mxu0 0.0
    %1383 = vmatpush2.msra.mxu0 0.0
    %1384 = vmatprep.subr.mxu0 0.0
    %1385 = vmatpush2.msra.mxu0 0.0
    %1386 = vmatprep.subr.mxu0 0.0
    %1387 = vmatpush2.msra.mxu0 0.0
    %1388 = vmatprep.subr.mxu0 0.0
    %1389 = vmatpush2.msra.mxu0 0.0
    %1390 = vmatprep.subr.mxu0 0.0
    %1391 = vmatpush2.msra.mxu0 0.0
    %1392 = vmatprep.subr.mxu0 0.0
    %1393 = vmatpush2.msra.mxu0 0.0
    %1394 = vmatprep.subr.mxu0 0.0
    %1395 = vmatpush2.msra.mxu0 0.0
    %1396 = vmatprep.subr.mxu0 0.0
    %1397 = vmatpush2.msra.mxu0 0.0
    %1398 = vmatprep.subr.mxu0 0.0
    %1399 = vmatpush2.msra.mxu0 0.0
    %1400 = vmatprep.subr.mxu0 0.0
    %1401 = vmatpush2.msra.mxu0 0.0
    %1402 = vmatprep.subr.mxu0 0.0
    %1403 = vmatpush2.msra.mxu0 0.0
    %1404 = vmatprep.subr.mxu0 0.0
    %1405 = vmatpush2.msra.mxu0 0.0
    %1406 = vmatprep.subr.mxu0 0.0
    %1407 = vmatpush2.msra.mxu0 0.0
    %1408 = vmatprep.subr.mxu0 0.0
    %1409 = vmatpush2.msra.mxu0 0.0
    %1410 = vmatprep.subr.mxu0 0.0
    %1411 = vmatpush2.msra.mxu0 0.0
    %1412 = vmatprep.mubr.f32.mxu0 0.0
    %1413 = vmatmul.mubr.f32.gmra.mxu0 %v622
    %v1414 = vpop.f32.mrf.mxu0
    %v1415 = vadd.f32 %v1333, %v1414
    %v1416 = vpop.f32.mrf.mxu0
    %1417 = vmatprep.mubr.f32.mxu0 0.0
    %1418 = vmatmul.mubr.f32.gmra.mxu0 %v625
    %v1419 = vpop.f32.mrf.mxu0
    %v1420 = vadd.f32 %v1338, %v1419
    %v1421 = vpop.f32.mrf.mxu0
    %1422 = vmatprep.mubr.f32.mxu0 0.0
    %1423 = vmatmul.mubr.f32.gmra.mxu0 %v628
    %v1424 = vpop.f32.mrf.mxu0
    %v1425 = vadd.f32 %v1343, %v1424
    %v1426 = vpop.f32.mrf.mxu0
    %1427 = vdwg.mxu0
    %v1428 = vadd.f32 %v1415, %v419
    %v1429 = vadd.f32 %v1420, %v425
    %v1430 = vadd.f32 %v1425, %v431
    %v1431 = vld [vmem:[%s8 + $0x4] sm:$0x1]
    %v1432 = vlaneseq
    %v1433 = vshrl.u32 %v1432, 7
    %v1434 = vsub.s32 0, %v1433
    %v1435 = vrot.slane %v1431, %v1434
    %v1436 = vadd.f32 %v1428, %v1435
    %v1437 = vadd.f32 %v1429, %v1435
    %v1438 = vadd.f32 %v1430, %v1435
    %1439 = vmatprep.subr.mxu0 0.0
    %1440 = vmatpush1.msra.mxu0 0.0
    %1441 = vmatprep.subr.mxu0 0.0
    %1442 = vmatpush1.msra.mxu0 0.0
    %1443 = vmatprep.subr.mxu0 0.0
    %1444 = vmatpush1.msra.mxu0 0.0
    %1445 = vmatprep.subr.mxu0 0.0
    %1446 = vmatpush1.msra.mxu0 0.0
    %1447 = vmatprep.subr.mxu0 0.0
    %1448 = vmatpush1.msra.mxu0 0.0
    %1449 = vmatprep.subr.mxu0 0.0
    %1450 = vmatpush1.msra.mxu0 0.0
    %1451 = vmatprep.subr.mxu0 0.0
    %1452 = vmatpush1.msra.mxu0 0.0
    %1453 = vmatprep.subr.mxu0 0.0
    %1454 = vmatpush1.msra.mxu0 0.0
    %1455 = vmatprep.subr.mxu0 0.0
    %1456 = vmatpush1.msra.mxu0 0.0
    %1457 = vmatprep.subr.mxu0 0.0
    %1458 = vmatpush1.msra.mxu0 0.0
    %1459 = vmatprep.subr.mxu0 0.0
    %1460 = vmatpush1.msra.mxu0 0.0
    %1461 = vmatprep.subr.mxu0 0.0
    %1462 = vmatpush1.msra.mxu0 0.0
    %1463 = vmatprep.subr.mxu0 0.0
    %1464 = vmatpush1.msra.mxu0 0.0
    %1465 = vmatprep.subr.mxu0 0.0
    %1466 = vmatpush1.msra.mxu0 %v1438
    %1467 = vmatprep.subr.mxu0 0.0
    %1468 = vmatpush1.msra.mxu0 %v1437
    %1469 = vmatprep.subr.mxu0 0.0
    %1470 = vmatpush1.msra.mxu0 %v1436
    %1471 = vmatprep.subr.mxu0 0.0
    %1472 = vmatpush2.msra.mxu0 0.0
    %1473 = vmatprep.subr.mxu0 0.0
    %1474 = vmatpush2.msra.mxu0 0.0
    %1475 = vmatprep.subr.mxu0 0.0
    %1476 = vmatpush2.msra.mxu0 0.0
    %1477 = vmatprep.subr.mxu0 0.0
    %1478 = vmatpush2.msra.mxu0 0.0
    %1479 = vmatprep.subr.mxu0 0.0
    %1480 = vmatpush2.msra.mxu0 0.0
    %1481 = vmatprep.subr.mxu0 0.0
    %1482 = vmatpush2.msra.mxu0 0.0
    %1483 = vmatprep.subr.mxu0 0.0
    %1484 = vmatpush2.msra.mxu0 0.0
    %1485 = vmatprep.subr.mxu0 0.0
    %1486 = vmatpush2.msra.mxu0 0.0
    %1487 = vmatprep.subr.mxu0 0.0
    %1488 = vmatpush2.msra.mxu0 0.0
    %1489 = vmatprep.subr.mxu0 0.0
    %1490 = vmatpush2.msra.mxu0 0.0
    %1491 = vmatprep.subr.mxu0 0.0
    %1492 = vmatpush2.msra.mxu0 0.0
    %1493 = vmatprep.subr.mxu0 0.0
    %1494 = vmatpush2.msra.mxu0 0.0
    %1495 = vmatprep.subr.mxu0 0.0
    %1496 = vmatpush2.msra.mxu0 0.0
    %1497 = vmatprep.subr.mxu0 0.0
    %1498 = vmatpush2.msra.mxu0 0.0
    %1499 = vmatprep.subr.mxu0 0.0
    %1500 = vmatpush2.msra.mxu0 0.0
    %1501 = vmatprep.subr.mxu0 0.0
    %1502 = vmatpush2.msra.mxu0 0.0
    %1503 = vmatprep.mubr.f32.mxu0 0.0
    %1504 = vmatmul.mubr.f32.gmra.mxu0 %v724
    %v1505 = vpop.f32.mrf.mxu0
    %v1506 = vadd.f32 0.0, %v1505
    %v1507 = vpop.f32.mrf.mxu0
    %1508 = vmatprep.mubr.f32.mxu0 0.0
    %1509 = vmatmul.mubr.f32.gmra.mxu0 %v727
    %v1510 = vpop.f32.mrf.mxu0
    %v1511 = vadd.f32 0.0, %v1510
    %v1512 = vpop.f32.mrf.mxu0
    %1513 = vdwg.mxu0
    %v1514 = vmax.f32 %v1506, 0.0
    %v1515 = vmax.f32 %v1511, 0.0
    %v1516 = vsel %vm340, %v1514, 0.0
    %vm1517 = vcmask 519168
    %v1518 = vsel %vm1517, %v1515, 0.0
    %v1519 = vadd.f32 %v1516, %v1518
    %v1520 = vrot.slane %v1519, 4
    %v1521 = vadd.f32 %v1519, %v1520
    %v1522 = vrot.slane %v1521, 2
    %v1523 = vadd.f32 %v1521, %v1522
    %v1524 = vrot.slane %v1523, 1
    %v1525 = vadd.f32 %v1523, %v1524
    %v1526 = vrcp.pop 12.0
    %v1527 = vmul.f32 %v1525, %v1526
    %v1528 = vld [vmem:[%s8 + $0x5] sm:$0x1]
    %v1529 = vld [vmem:[%s8 + $0x6] sm:$0x1]
    %v1530 = vld [vmem:[%s9] sm:$0xff]
    %v1531 = vld [vmem:[%s9 + $0x8] sm:$0xff]
    %v1532 = vld [vmem:[%s9 + $0x10] sm:$0xff]
    %v1533 = vld [vmem:[%s9 + $0x18] sm:$0xff]
    %v1534 = vld [vmem:[%s9 + $0x20] sm:$0xff]
    %v1535 = vld [vmem:[%s9 + $0x28] sm:$0xff]
    %v1536 = vld [vmem:[%s9 + $0x30] sm:$0xff]
    %v1537 = vld [vmem:[%s9 + $0x38] sm:$0xff]
    %v1539 = vsel %vm340, %v1527, 0
    %1541 = vmatprep.subr.mxu0 0.0
    %1542 = vmatpush1.msra.mxu0 0.0
    %1543 = vmatprep.subr.mxu0 0.0
    %1544 = vmatpush1.msra.mxu0 0.0
    %1545 = vmatprep.subr.mxu0 0.0
    %1546 = vmatpush1.msra.mxu0 0.0
    %1547 = vmatprep.subr.mxu0 0.0
    %1548 = vmatpush1.msra.mxu0 0.0
    %1549 = vmatprep.subr.mxu0 0.0
    %1550 = vmatpush1.msra.mxu0 0.0
    %1551 = vmatprep.subr.mxu0 0.0
    %1552 = vmatpush1.msra.mxu0 0.0
    %1553 = vmatprep.subr.mxu0 0.0
    %1554 = vmatpush1.msra.mxu0 0.0
    %1555 = vmatprep.subr.mxu0 0.0
    %1556 = vmatpush1.msra.mxu0 0.0
    %1557 = vmatprep.subr.mxu0 0.0
    %1558 = vmatpush1.msra.mxu0 %v1537
    %1559 = vmatprep.subr.mxu0 0.0
    %1560 = vmatpush1.msra.mxu0 %v1536
    %1561 = vmatprep.subr.mxu0 0.0
    %1562 = vmatpush1.msra.mxu0 %v1535
    %1563 = vmatprep.subr.mxu0 0.0
    %1564 = vmatpush1.msra.mxu0 %v1534
    %1565 = vmatprep.subr.mxu0 0.0
    %1566 = vmatpush1.msra.mxu0 %v1533
    %1567 = vmatprep.subr.mxu0 0.0
    %1568 = vmatpush1.msra.mxu0 %v1532
    %1569 = vmatprep.subr.mxu0 0.0
    %1570 = vmatpush1.msra.mxu0 %v1531
    %1571 = vmatprep.subr.mxu0 0.0
    %1572 = vmatpush1.msra.mxu0 %v1530
    %1573 = vmatprep.subr.mxu0 0.0
    %1574 = vmatpush2.msra.mxu0 0.0
    %1575 = vmatprep.subr.mxu0 0.0
    %1576 = vmatpush2.msra.mxu0 0.0
    %1577 = vmatprep.subr.mxu0 0.0
    %1578 = vmatpush2.msra.mxu0 0.0
    %1579 = vmatprep.subr.mxu0 0.0
    %1580 = vmatpush2.msra.mxu0 0.0
    %1581 = vmatprep.subr.mxu0 0.0
    %1582 = vmatpush2.msra.mxu0 0.0
    %1583 = vmatprep.subr.mxu0 0.0
    %1584 = vmatpush2.msra.mxu0 0.0
    %1585 = vmatprep.subr.mxu0 0.0
    %1586 = vmatpush2.msra.mxu0 0.0
    %1587 = vmatprep.subr.mxu0 0.0
    %1588 = vmatpush2.msra.mxu0 0.0
    %1589 = vmatprep.subr.mxu0 0.0
    %1590 = vmatpush2.msra.mxu0 0.0
    %1591 = vmatprep.subr.mxu0 0.0
    %1592 = vmatpush2.msra.mxu0 0.0
    %1593 = vmatprep.subr.mxu0 0.0
    %1594 = vmatpush2.msra.mxu0 0.0
    %1595 = vmatprep.subr.mxu0 0.0
    %1596 = vmatpush2.msra.mxu0 0.0
    %1597 = vmatprep.subr.mxu0 0.0
    %1598 = vmatpush2.msra.mxu0 0.0
    %1599 = vmatprep.subr.mxu0 0.0
    %1600 = vmatpush2.msra.mxu0 0.0
    %1601 = vmatprep.subr.mxu0 0.0
    %1602 = vmatpush2.msra.mxu0 0.0
    %1603 = vmatprep.subr.mxu0 0.0
    %1604 = vmatpush2.msra.mxu0 0.0
    %1605 = vmatprep.mubr.f32.mxu0 0.0
    %1606 = vmatmul.mubr.f32.gmra.mxu0 %v1539
    %v1607 = vpop.f32.mrf.mxu0
    %v1608 = vadd.f32 %v1528, %v1607
    %v1609 = vpop.f32.mrf.mxu0
    %1610 = vdwg.mxu0
    %v1611 = vmax.f32 %v1608, 0.0
    %v1612 = vld [vmem:[%s10] sm:$0xff]
    %v1613 = vld [vmem:[%s10 + $0x8] sm:$0xff]
    %v1614 = vld [vmem:[%s10 + $0x10] sm:$0xff]
    %v1615 = vld [vmem:[%s10 + $0x18] sm:$0xff]
    %vm1616 = vcmask 261120
    %v1618 = vsel %vm1616, %v1611, 0
    %1620 = vmatprep.subr.mxu0 0.0
    %1621 = vmatpush1.msra.mxu0 0.0
    %1622 = vmatprep.subr.mxu0 0.0
    %1623 = vmatpush1.msra.mxu0 0.0
    %1624 = vmatprep.subr.mxu0 0.0
    %1625 = vmatpush1.msra.mxu0 0.0
    %1626 = vmatprep.subr.mxu0 0.0
    %1627 = vmatpush1.msra.mxu0 0.0
    %1628 = vmatprep.subr.mxu0 0.0
    %1629 = vmatpush1.msra.mxu0 0.0
    %1630 = vmatprep.subr.mxu0 0.0
    %1631 = vmatpush1.msra.mxu0 0.0
    %1632 = vmatprep.subr.mxu0 0.0
    %1633 = vmatpush1.msra.mxu0 0.0
    %1634 = vmatprep.subr.mxu0 0.0
    %1635 = vmatpush1.msra.mxu0 0.0
    %1636 = vmatprep.subr.mxu0 0.0
    %1637 = vmatpush1.msra.mxu0 0.0
    %1638 = vmatprep.subr.mxu0 0.0
    %1639 = vmatpush1.msra.mxu0 0.0
    %1640 = vmatprep.subr.mxu0 0.0
    %1641 = vmatpush1.msra.mxu0 0.0
    %1642 = vmatprep.subr.mxu0 0.0
    %1643 = vmatpush1.msra.mxu0 0.0
    %1644 = vmatprep.subr.mxu0 0.0
    %1645 = vmatpush1.msra.mxu0 %v1615
    %1646 = vmatprep.subr.mxu0 0.0
    %1647 = vmatpush1.msra.mxu0 %v1614
    %1648 = vmatprep.subr.mxu0 0.0
    %1649 = vmatpush1.msra.mxu0 %v1613
    %1650 = vmatprep.subr.mxu0 0.0
    %1651 = vmatpush1.msra.mxu0 %v1612
    %1652 = vmatprep.subr.mxu0 0.0
    %1653 = vmatpush2.msra.mxu0 0.0
    %1654 = vmatprep.subr.mxu0 0.0
    %1655 = vmatpush2.msra.mxu0 0.0
    %1656 = vmatprep.subr.mxu0 0.0
    %1657 = vmatpush2.msra.mxu0 0.0
    %1658 = vmatprep.subr.mxu0 0.0
    %1659 = vmatpush2.msra.mxu0 0.0
    %1660 = vmatprep.subr.mxu0 0.0
    %1661 = vmatpush2.msra.mxu0 0.0
    %1662 = vmatprep.subr.mxu0 0.0
    %1663 = vmatpush2.msra.mxu0 0.0
    %1664 = vmatprep.subr.mxu0 0.0
    %1665 = vmatpush2.msra.mxu0 0.0
    %1666 = vmatprep.subr.mxu0 0.0
    %1667 = vmatpush2.msra.mxu0 0.0
    %1668 = vmatprep.subr.mxu0 0.0
    %1669 = vmatpush2.msra.mxu0 0.0
    %1670 = vmatprep.subr.mxu0 0.0
    %1671 = vmatpush2.msra.mxu0 0.0
    %1672 = vmatprep.subr.mxu0 0.0
    %1673 = vmatpush2.msra.mxu0 0.0
    %1674 = vmatprep.subr.mxu0 0.0
    %1675 = vmatpush2.msra.mxu0 0.0
    %1676 = vmatprep.subr.mxu0 0.0
    %1677 = vmatpush2.msra.mxu0 0.0
    %1678 = vmatprep.subr.mxu0 0.0
    %1679 = vmatpush2.msra.mxu0 0.0
    %1680 = vmatprep.subr.mxu0 0.0
    %1681 = vmatpush2.msra.mxu0 0.0
    %1682 = vmatprep.subr.mxu0 0.0
    %1683 = vmatpush2.msra.mxu0 0.0
    %1684 = vmatprep.mubr.f32.mxu0 0.0
    %1685 = vmatmul.mubr.f32.gmra.mxu0 %v1618
    %v1686 = vpop.f32.mrf.mxu0
    %v1687 = vadd.f32 %v1529, %v1686
    %v1688 = vpop.f32.mrf.mxu0
    %1689 = vdwg.mxu0
    %vm1690 = vcmask 0
    %1691 = vst.msk [vmem:[#allocation5] sm:$0x1] %vm1690, %v1687
    // Predicated region
    $region50: #{tpu_custom_call.1} parent=1 // pred_check
      _
    $region51: #{tpu_custom_call.1} parent=1 // pred_check_branch
      %1693 = sbr.rel (0) target = $region53
    $region52: #{tpu_custom_call.1} parent=1 // pred_region
      %s1695 = ssub.s32 16, 16
      %1696 = vsyncadd [#allocation4], %s1695
      %s1698 = sshll.u32 [#allocation5], 4
      %s1699 = int_to_ptr.vmem [resolvable:$true] %s1698
      %1701 = dma.vmem_to_hbm [thread:$0]  %s1699, 16, %s11, [#allocation4]
    $region53: #{tpu_custom_call.1} parent=1 // pred_fallthru
      _
    // Predicated region
    $region54: #{tpu_custom_call.1} parent=1 // pred_check
      _
    $region55: #{tpu_custom_call.1} parent=1 // pred_check_branch
      %1703 = sbr.rel (0) target = $region57
    $region56: #{tpu_custom_call.1} parent=1 // pred_region
      %1704 = dma.done [#allocation4], 16
    $region57: #{tpu_custom_call.1} parent=1 // pred_fallthru
      _
    %1705 = vsyncpa [#allocation3], 1
    %1706 = vsyncpa [#allocation4], 1

</llo_original>
